<compile_context>
chip_gen: v5e
topology: v5e:2x2
jax: 0.10.0
libtpu: 0.0.40
codegen_flags: <defaults>
</compile_context>

<pallas_src>
from functools import partial

import jax
import jax.numpy as jnp
from jax.experimental import pallas as pl
from jax.experimental.pallas import tpu as pltpu


def _clr_kernel(bblk, dim, x_ref, w2_ref, w1t_ref, b12_ref, w3_ref, b3_ref,
                wft_ref, bf_ref, out_ref, t_sc, y3_sc):
    """One grid step = `bblk` samples.

    x_ref  : (bblk*64, 64)  rows are (sample, channel c), cols are length l
    w2_ref : (32, 64)       conv2 weight            W2[m, l]
    w1t_ref: (64, OL)       conv1 weight transposed W1[o, c]^T
    b12_ref: (32, OL)       folded conv1+conv2 bias
    w3_ref : (dim, 32)      conv3 weight
    b3_ref : (dim, 1)       conv3 bias (column)
    wft_ref: (OL, OL)       fc1 weight transposed
    bf_ref : (1, OL)        fc1 bias (row)
    out_ref: (bblk*dim, OL) rows are (sample, dim)
    t_sc   : VMEM (bblk*32, 64)  scratch: t[(b,m), c]
    y3_sc  : VMEM (bblk*dim, OL) scratch: y3[(b,d), o]
    """
    w2 = w2_ref[...]

    # Stage 1: per-sample contraction over the original length axis L
    #   t[(b,m), c] = sum_l W2[m, l] * x[b, c, l]
    # (A @ B^T form: contract the last axis of both operands; no input transpose.)
    for b in range(bblk):
        xb = x_ref[pl.ds(b * 64, 64), :]                       # (C=64, L=64)
        t_sc[pl.ds(b * 32, 32), :] = jax.lax.dot_general(
            w2, xb, (((1,), (1,)), ((), ())),
            preferred_element_type=jnp.float32)                # (32, 64) = (m, c)

    # Stage 2: ONE stacked matmul over C for the whole batch block (M = bblk*32).
    #   y2_raw[(b,m), o] = sum_c t[(b,m), c] * W1[o, c]
    y2_raw = jnp.dot(t_sc[...], w1t_ref[...],
                     preferred_element_type=jnp.float32)       # (bblk*32, OL)

    # Stage 3: per-sample folded bias + ReLU, then conv3 + ReLU.
    b12 = b12_ref[...]
    w3 = w3_ref[...]
    b3 = b3_ref[...]
    for b in range(bblk):
        y2_b = jnp.maximum(y2_raw[b * 32:(b + 1) * 32, :] + b12, 0.0)   # (32, OL)
        y3_b = jnp.maximum(
            jnp.dot(w3, y2_b, preferred_element_type=jnp.float32) + b3,
            0.0)                                                        # (dim, OL)
        y3_sc[pl.ds(b * dim, dim), :] = y3_b

    # Stage 4: stacked fc1 (M = bblk*dim) + sigmoid; lane-dense (OL) output store.
    z = jnp.dot(y3_sc[...], wft_ref[...],
                preferred_element_type=jnp.float32) + bf_ref[...]       # (bblk*dim, OL)
    out_ref[...] = jax.nn.sigmoid(z)


def prepare_params(params):
    """Hoisted (one-time) weight transposes / bias folding for the kernel."""
    w1, b1, w2, b2, w3, b3, wf, bf = params
    OL = w1.shape[0]
    dim = w3.shape[0]
    w1t = w1.T                                                    # (64, OL)
    # relu(W2 @ (W1 x + b1) + b2) == relu((W2 x) W1^T + b12) with
    # b12[m, o] = (sum_l W2[m, l]) * b1[o] + b2[m]
    b12 = w2.sum(axis=1)[:, None] * b1[None, :] + b2[:, None]     # (32, OL)
    wft = wf.T                                                    # (OL, OL)
    return (w2, w1t, b12, w3, b3.reshape(dim, 1), wft, bf.reshape(1, OL))


@partial(jax.jit, static_argnames=("dim", "output_length", "block_batch"))
def characteristic_line_reverser(x, prepared, *, dim, output_length, block_batch=8):
    """x: (B, 64, 64) float32 in the PyTorch NCL layout. Returns (B, dim, OL)."""
    B, C, L = x.shape
    assert C == 64 and L == 64, "module requires 64 in-channels and length 64"
    OL = output_length
    w2, w1t, b12, w3, b3c, wft, bfr = prepared
    assert wft.shape == (OL, OL) and w3.shape[0] == dim

    # Choose the per-step batch block. Keep the 2-D output block (bblk*dim, OL)
    # 8-sublane aligned unless a single block covers the whole (padded) batch.
    bblk = max(1, min(block_batch, B))
    if bblk < B and (bblk * dim) % 8 != 0:
        bblk = min(B, ((bblk + 7) // 8) * 8)
    nblk = -(-B // bblk)
    Bpad = nblk * bblk
    if Bpad != B:
        x = jnp.pad(x, ((0, Bpad - B), (0, 0), (0, 0)))

    # Native layout kept: this reshape is row-major / metadata only (no HBM transpose).
    x2d = x.reshape(Bpad * 64, 64)                   # rows = (b, c), cols = l

    grid_spec = pltpu.PrefetchScalarGridSpec(
        num_scalar_prefetch=0,
        grid=(nblk,),
        in_specs=[
            pl.BlockSpec((bblk * 64, 64), lambda i: (i, 0)),   # x slab per batch block
            pl.BlockSpec((32, 64), lambda i: (0, 0)),          # W2
            pl.BlockSpec((64, OL), lambda i: (0, 0)),          # W1^T
            pl.BlockSpec((32, OL), lambda i: (0, 0)),          # folded bias b12
            pl.BlockSpec((dim, 32), lambda i: (0, 0)),         # W3
            pl.BlockSpec((dim, 1), lambda i: (0, 0)),          # b3
            pl.BlockSpec((OL, OL), lambda i: (0, 0)),          # Wf^T
            pl.BlockSpec((1, OL), lambda i: (0, 0)),           # bf
        ],
        out_specs=pl.BlockSpec((bblk * dim, OL), lambda i: (i, 0)),
        scratch_shapes=[
            pltpu.VMEM((bblk * 32, 64), jnp.float32),          # t[(b,m), c]
            pltpu.VMEM((bblk * dim, OL), jnp.float32),         # y3[(b,d), o]
        ],
    )

    out2d = pl.pallas_call(
        partial(_clr_kernel, bblk, dim),
        out_shape=jax.ShapeDtypeStruct((Bpad * dim, OL), jnp.float32),
        grid_spec=grid_spec,
        compiler_params=pltpu.CompilerParams(
            dimension_semantics=("parallel",)),
    )(x2d, w2, w1t, b12, w3, b3c, wft, bfr)

    out = out2d.reshape(Bpad, dim, OL)
    if Bpad != B:
        out = out[:B]
    return out


def ref_forward(x, params):
    """Pure-JAX reference mirroring the PyTorch forward exactly."""
    w1, b1, w2, b2, w3, b3, wf, bf = params
    y1 = jnp.einsum('oc,bcl->bol', w1, x) + b1[None, :, None]       # conv1
    t = jnp.transpose(y1, (0, 2, 1))                                # transpose(1,2)
    y2 = jax.nn.relu(jnp.einsum('mc,bcl->bml', w2, t) + b2[None, :, None])
    y3 = jax.nn.relu(jnp.einsum('dm,bml->bdl', w3, y2) + b3[None, :, None])
    y4 = jax.nn.sigmoid(jnp.einsum('bdl,pl->bdp', y3, wf) + bf[None, None, :])
    return y4


if __name__ == "__main__":
    DIM = 3
    OL = 128          # output_length (small, lane-dense choice)
    B = 16            # 2 grid steps of 8 samples each (keeps both v7x TCs busy)

    key = jax.random.PRNGKey(0)
    ks = jax.random.split(key, 9)

    def uinit(k, shape, fan_in):
        bound = 1.0 / (fan_in ** 0.5)
        return jax.random.uniform(k, shape, jnp.float32, -bound, bound)

    # Deterministic parameter init (PyTorch-default-style uniform bounds).
    w1 = uinit(ks[0], (OL, 64), 64);  b1 = uinit(ks[1], (OL,), 64)    # Conv1d(64, OL, 1)
    w2 = uinit(ks[2], (32, 64), 64);  b2 = uinit(ks[3], (32,), 64)    # Conv1d(64, 32, 1)
    w3 = uinit(ks[4], (DIM, 32), 32); b3 = uinit(ks[5], (DIM,), 32)   # Conv1d(32, dim, 1)
    wf = uinit(ks[6], (OL, OL), OL);  bf = uinit(ks[7], (OL,), OL)    # Linear(OL, OL)
    params = (w1, b1, w2, b2, w3, b3, wf, bf)

    # Input: (B, 64, 64) — the forward's transpose(1,2) forces length == 64.
    x = jax.random.normal(ks[8], (B, 64, 64), jnp.float32)

    prepared = prepare_params(params)   # hoisted weight transposes / bias folding

    out = characteristic_line_reverser(x, prepared, dim=DIM, output_length=OL,
                                       block_batch=8)
    out = jax.block_until_ready(out)
    ref = ref_forward(x, params)
    assert out.shape == (B, DIM, OL), out.shape
    # Tolerance is slightly looser than bit-level because the conv1/conv2 chain is
    # re-associated (different f32 accumulation order than the reference).
    err = float(jnp.max(jnp.abs(out - ref)))
    assert err < 1e-4, err

    # Also exercise a batch that does not divide the block size (padding path).
    x5 = x[:5]
    out5 = jax.block_until_ready(
        characteristic_line_reverser(x5, prepared, dim=DIM, output_length=OL,
                                     block_batch=8))
    assert out5.shape == (5, DIM, OL), out5.shape
    err5 = float(jnp.max(jnp.abs(out5 - ref_forward(x5, params))))
    assert err5 < 1e-4, err5

    print("KERNEL_OK")
</pallas_src>

<mosaic_0001>
module attributes {stable_mosaic.version = 11 : i64} {
  func.func @_clr_kernel(%arg0: i32, %arg1: memref<512x64xf32, #tpu.memory_space<vmem>>, %arg2: memref<32x64xf32, #tpu.memory_space<vmem>>, %arg3: memref<64x128xf32, #tpu.memory_space<vmem>>, %arg4: memref<32x128xf32, #tpu.memory_space<vmem>>, %arg5: memref<3x32xf32, #tpu.memory_space<vmem>>, %arg6: memref<3x1xf32, #tpu.memory_space<vmem>>, %arg7: memref<128x128xf32, #tpu.memory_space<vmem>>, %arg8: memref<1x128xf32, #tpu.memory_space<vmem>>, %arg9: memref<24x128xf32, #tpu.memory_space<vmem>>, %arg10: memref<256x64xf32, #tpu.memory_space<vmem>>, %arg11: memref<24x128xf32, #tpu.memory_space<vmem>>) attributes {dimension_semantics = [#tpu.dimension_semantics<parallel>], iteration_bounds = array<i64: 2>, scalar_prefetch = 0 : i64, scratch_operands = 2 : i64, tpu.core_type = #tpu.core_type<tc>, window_params = [{transform_indices = @transform_0, window_bounds = array<i64: 512, 64>}, {pipeline_mode = #tpu.pipeline_mode<synchronous>, transform_indices = @transform_1, window_bounds = array<i64: 32, 64>}, {pipeline_mode = #tpu.pipeline_mode<synchronous>, transform_indices = @transform_2, window_bounds = array<i64: 64, 128>}, {pipeline_mode = #tpu.pipeline_mode<synchronous>, transform_indices = @transform_3, window_bounds = array<i64: 32, 128>}, {pipeline_mode = #tpu.pipeline_mode<synchronous>, transform_indices = @transform_4, window_bounds = array<i64: 3, 32>}, {pipeline_mode = #tpu.pipeline_mode<synchronous>, transform_indices = @transform_5, window_bounds = array<i64: 3, 1>}, {pipeline_mode = #tpu.pipeline_mode<synchronous>, transform_indices = @transform_6, window_bounds = array<i64: 128, 128>}, {pipeline_mode = #tpu.pipeline_mode<synchronous>, transform_indices = @transform_7, window_bounds = array<i64: 1, 128>}, {transform_indices = @transform_8, window_bounds = array<i64: 24, 128>}]} {
    %c0 = arith.constant 0 : index
    %c0_0 = arith.constant 0 : index
    %0 = vector.load %arg2[%c0, %c0_0] : memref<32x64xf32, #tpu.memory_space<vmem>>, vector<32x64xf32>
    %c0_1 = arith.constant 0 : index
    %c0_2 = arith.constant 0 : index
    %1 = vector.load %arg1[%c0_1, %c0_2] : memref<512x64xf32, #tpu.memory_space<vmem>>, vector<64x64xf32>
    %cst = arith.constant dense<0.000000e+00> : vector<32x64xf32>
    %2 = tpu.matmul %0, %1, %cst {dimension_numbers = #tpu.dot_dimension_numbers<[1], [1], [0], [0], [0, 0, 1, 0], [], []>} : vector<32x64xf32>, vector<64x64xf32>, vector<32x64xf32> -> vector<32x64xf32>
    %c0_3 = arith.constant 0 : index
    %c0_4 = arith.constant 0 : index
    %3 = vector.load %arg10[%c0_3, %c0_4] : memref<256x64xf32, #tpu.memory_space<vmem>>, vector<32x64xf32>
    tpu.vector_store %arg10[%c0_3, %c0_4], %2 {strides = array<i32>} : memref<256x64xf32, #tpu.memory_space<vmem>>, vector<32x64xf32>,
    %c64 = arith.constant 64 : index
    %c0_5 = arith.constant 0 : index
    %4 = vector.load %arg1[%c64, %c0_5] : memref<512x64xf32, #tpu.memory_space<vmem>>, vector<64x64xf32>
    %cst_6 = arith.constant dense<0.000000e+00> : vector<32x64xf32>
    %5 = tpu.matmul %0, %4, %cst_6 {dimension_numbers = #tpu.dot_dimension_numbers<[1], [1], [0], [0], [0, 0, 1, 0], [], []>} : vector<32x64xf32>, vector<64x64xf32>, vector<32x64xf32> -> vector<32x64xf32>
    %c32 = arith.constant 32 : index
    %c0_7 = arith.constant 0 : index
    %6 = vector.load %arg10[%c32, %c0_7] : memref<256x64xf32, #tpu.memory_space<vmem>>, vector<32x64xf32>
    tpu.vector_store %arg10[%c32, %c0_7], %5 {strides = array<i32>} : memref<256x64xf32, #tpu.memory_space<vmem>>, vector<32x64xf32>,
    %c128 = arith.constant 128 : index
    %c0_8 = arith.constant 0 : index
    %7 = vector.load %arg1[%c128, %c0_8] : memref<512x64xf32, #tpu.memory_space<vmem>>, vector<64x64xf32>
    %cst_9 = arith.constant dense<0.000000e+00> : vector<32x64xf32>
    %8 = tpu.matmul %0, %7, %cst_9 {dimension_numbers = #tpu.dot_dimension_numbers<[1], [1], [0], [0], [0, 0, 1, 0], [], []>} : vector<32x64xf32>, vector<64x64xf32>, vector<32x64xf32> -> vector<32x64xf32>
    %c64_10 = arith.constant 64 : index
    %c0_11 = arith.constant 0 : index
    %9 = vector.load %arg10[%c64_10, %c0_11] : memref<256x64xf32, #tpu.memory_space<vmem>>, vector<32x64xf32>
    tpu.vector_store %arg10[%c64_10, %c0_11], %8 {strides = array<i32>} : memref<256x64xf32, #tpu.memory_space<vmem>>, vector<32x64xf32>,
    %c192 = arith.constant 192 : index
    %c0_12 = arith.constant 0 : index
    %10 = vector.load %arg1[%c192, %c0_12] : memref<512x64xf32, #tpu.memory_space<vmem>>, vector<64x64xf32>
    %cst_13 = arith.constant dense<0.000000e+00> : vector<32x64xf32>
    %11 = tpu.matmul %0, %10, %cst_13 {dimension_numbers = #tpu.dot_dimension_numbers<[1], [1], [0], [0], [0, 0, 1, 0], [], []>} : vector<32x64xf32>, vector<64x64xf32>, vector<32x64xf32> -> vector<32x64xf32>
    %c96 = arith.constant 96 : index
    %c0_14 = arith.constant 0 : index
    %12 = vector.load %arg10[%c96, %c0_14] : memref<256x64xf32, #tpu.memory_space<vmem>>, vector<32x64xf32>
    tpu.vector_store %arg10[%c96, %c0_14], %11 {strides = array<i32>} : memref<256x64xf32, #tpu.memory_space<vmem>>, vector<32x64xf32>,
    %c256 = arith.constant 256 : index
    %c0_15 = arith.constant 0 : index
    %13 = vector.load %arg1[%c256, %c0_15] : memref<512x64xf32, #tpu.memory_space<vmem>>, vector<64x64xf32>
    %cst_16 = arith.constant dense<0.000000e+00> : vector<32x64xf32>
    %14 = tpu.matmul %0, %13, %cst_16 {dimension_numbers = #tpu.dot_dimension_numbers<[1], [1], [0], [0], [0, 0, 1, 0], [], []>} : vector<32x64xf32>, vector<64x64xf32>, vector<32x64xf32> -> vector<32x64xf32>
    %c128_17 = arith.constant 128 : index
    %c0_18 = arith.constant 0 : index
    %15 = vector.load %arg10[%c128_17, %c0_18] : memref<256x64xf32, #tpu.memory_space<vmem>>, vector<32x64xf32>
    tpu.vector_store %arg10[%c128_17, %c0_18], %14 {strides = array<i32>} : memref<256x64xf32, #tpu.memory_space<vmem>>, vector<32x64xf32>,
    %c320 = arith.constant 320 : index
    %c0_19 = arith.constant 0 : index
    %16 = vector.load %arg1[%c320, %c0_19] : memref<512x64xf32, #tpu.memory_space<vmem>>, vector<64x64xf32>
    %cst_20 = arith.constant dense<0.000000e+00> : vector<32x64xf32>
    %17 = tpu.matmul %0, %16, %cst_20 {dimension_numbers = #tpu.dot_dimension_numbers<[1], [1], [0], [0], [0, 0, 1, 0], [], []>} : vector<32x64xf32>, vector<64x64xf32>, vector<32x64xf32> -> vector<32x64xf32>
    %c160 = arith.constant 160 : index
    %c0_21 = arith.constant 0 : index
    %18 = vector.load %arg10[%c160, %c0_21] : memref<256x64xf32, #tpu.memory_space<vmem>>, vector<32x64xf32>
    tpu.vector_store %arg10[%c160, %c0_21], %17 {strides = array<i32>} : memref<256x64xf32, #tpu.memory_space<vmem>>, vector<32x64xf32>,
    %c384 = arith.constant 384 : index
    %c0_22 = arith.constant 0 : index
    %19 = vector.load %arg1[%c384, %c0_22] : memref<512x64xf32, #tpu.memory_space<vmem>>, vector<64x64xf32>
    %cst_23 = arith.constant dense<0.000000e+00> : vector<32x64xf32>
    %20 = tpu.matmul %0, %19, %cst_23 {dimension_numbers = #tpu.dot_dimension_numbers<[1], [1], [0], [0], [0, 0, 1, 0], [], []>} : vector<32x64xf32>, vector<64x64xf32>, vector<32x64xf32> -> vector<32x64xf32>
    %c192_24 = arith.constant 192 : index
    %c0_25 = arith.constant 0 : index
    %21 = vector.load %arg10[%c192_24, %c0_25] : memref<256x64xf32, #tpu.memory_space<vmem>>, vector<32x64xf32>
    tpu.vector_store %arg10[%c192_24, %c0_25], %20 {strides = array<i32>} : memref<256x64xf32, #tpu.memory_space<vmem>>, vector<32x64xf32>,
    %c448 = arith.constant 448 : index
    %c0_26 = arith.constant 0 : index
    %22 = vector.load %arg1[%c448, %c0_26] : memref<512x64xf32, #tpu.memory_space<vmem>>, vector<64x64xf32>
    %cst_27 = arith.constant dense<0.000000e+00> : vector<32x64xf32>
    %23 = tpu.matmul %0, %22, %cst_27 {dimension_numbers = #tpu.dot_dimension_numbers<[1], [1], [0], [0], [0, 0, 1, 0], [], []>} : vector<32x64xf32>, vector<64x64xf32>, vector<32x64xf32> -> vector<32x64xf32>
    %c224 = arith.constant 224 : index
    %c0_28 = arith.constant 0 : index
    %24 = vector.load %arg10[%c224, %c0_28] : memref<256x64xf32, #tpu.memory_space<vmem>>, vector<32x64xf32>
    tpu.vector_store %arg10[%c224, %c0_28], %23 {strides = array<i32>} : memref<256x64xf32, #tpu.memory_space<vmem>>, vector<32x64xf32>,
    %c0_29 = arith.constant 0 : index
    %c0_30 = arith.constant 0 : index
    %25 = vector.load %arg10[%c0_29, %c0_30] : memref<256x64xf32, #tpu.memory_space<vmem>>, vector<256x64xf32>
    %c0_31 = arith.constant 0 : index
    %c0_32 = arith.constant 0 : index
    %26 = vector.load %arg3[%c0_31, %c0_32] : memref<64x128xf32, #tpu.memory_space<vmem>>, vector<64x128xf32>
    %cst_33 = arith.constant dense<0.000000e+00> : vector<256x128xf32>
    %27 = tpu.matmul %25, %26, %cst_33 {dimension_numbers = #tpu.dot_dimension_numbers<[1], [0], [0], [1], [0, 0, 1, 1], [], []>} : vector<256x64xf32>, vector<64x128xf32>, vector<256x128xf32> -> vector<256x128xf32>
    %c0_34 = arith.constant 0 : index
    %c0_35 = arith.constant 0 : index
    %28 = vector.load %arg4[%c0_34, %c0_35] : memref<32x128xf32, #tpu.memory_space<vmem>>, vector<32x128xf32>
    %c0_36 = arith.constant 0 : index
    %c0_37 = arith.constant 0 : index
    %29 = vector.load %arg5[%c0_36, %c0_37] : memref<3x32xf32, #tpu.memory_space<vmem>>, vector<3x32xf32>
    %c0_38 = arith.constant 0 : index
    %c0_39 = arith.constant 0 : index
    %30 = vector.load %arg6[%c0_38, %c0_39] : memref<3x1xf32, #tpu.memory_space<vmem>>, vector<3x1xf32>
    %31 = vector.extract_strided_slice %27 {offsets = [0, 0], sizes = [32, 128], strides = [1, 1]} : vector<256x128xf32> to vector<32x128xf32>
    %32 = arith.addf %31, %28 : vector<32x128xf32>
    %cst_40 = arith.constant 0.000000e+00 : f32
    %33 = vector.broadcast %cst_40 : f32 to vector<32x128xf32>
    %34 = arith.maximumf %32, %33 : vector<32x128xf32>
    %cst_41 = arith.constant dense<0.000000e+00> : vector<3x128xf32>
    %35 = tpu.matmul %29, %34, %cst_41 {dimension_numbers = #tpu.dot_dimension_numbers<[1], [0], [0], [1], [0, 0, 1, 1], [], []>} : vector<3x32xf32>, vector<32x128xf32>, vector<3x128xf32> -> vector<3x128xf32>
    %36 = vector.broadcast %30 : vector<3x1xf32> to vector<3x128xf32>
    %37 = arith.addf %35, %36 : vector<3x128xf32>
    %cst_42 = arith.constant 0.000000e+00 : f32
    %38 = vector.broadcast %cst_42 : f32 to vector<3x128xf32>
    %39 = arith.maximumf %37, %38 : vector<3x128xf32>
    %c0_43 = arith.constant 0 : index
    %c0_44 = arith.constant 0 : index
    %40 = vector.load %arg11[%c0_43, %c0_44] : memref<24x128xf32, #tpu.memory_space<vmem>>, vector<3x128xf32>
    tpu.vector_store %arg11[%c0_43, %c0_44], %39 {strides = array<i32>} : memref<24x128xf32, #tpu.memory_space<vmem>>, vector<3x128xf32>,
    %41 = vector.extract_strided_slice %27 {offsets = [32, 0], sizes = [32, 128], strides = [1, 1]} : vector<256x128xf32> to vector<32x128xf32>
    %42 = arith.addf %41, %28 : vector<32x128xf32>
    %cst_45 = arith.constant 0.000000e+00 : f32
    %43 = vector.broadcast %cst_45 : f32 to vector<32x128xf32>
    %44 = arith.maximumf %42, %43 : vector<32x128xf32>
    %cst_46 = arith.constant dense<0.000000e+00> : vector<3x128xf32>
    %45 = tpu.matmul %29, %44, %cst_46 {dimension_numbers = #tpu.dot_dimension_numbers<[1], [0], [0], [1], [0, 0, 1, 1], [], []>} : vector<3x32xf32>, vector<32x128xf32>, vector<3x128xf32> -> vector<3x128xf32>
    %46 = vector.broadcast %30 : vector<3x1xf32> to vector<3x128xf32>
    %47 = arith.addf %45, %46 : vector<3x128xf32>
    %cst_47 = arith.constant 0.000000e+00 : f32
    %48 = vector.broadcast %cst_47 : f32 to vector<3x128xf32>
    %49 = arith.maximumf %47, %48 : vector<3x128xf32>
    %c3 = arith.constant 3 : index
    %c0_48 = arith.constant 0 : index
    %50 = vector.load %arg11[%c3, %c0_48] : memref<24x128xf32, #tpu.memory_space<vmem>>, vector<3x128xf32>
    tpu.vector_store %arg11[%c3, %c0_48], %49 {strides = array<i32>} : memref<24x128xf32, #tpu.memory_space<vmem>>, vector<3x128xf32>,
    %51 = vector.extract_strided_slice %27 {offsets = [64, 0], sizes = [32, 128], strides = [1, 1]} : vector<256x128xf32> to vector<32x128xf32>
    %52 = arith.addf %51, %28 : vector<32x128xf32>
    %cst_49 = arith.constant 0.000000e+00 : f32
    %53 = vector.broadcast %cst_49 : f32 to vector<32x128xf32>
    %54 = arith.maximumf %52, %53 : vector<32x128xf32>
    %cst_50 = arith.constant dense<0.000000e+00> : vector<3x128xf32>
    %55 = tpu.matmul %29, %54, %cst_50 {dimension_numbers = #tpu.dot_dimension_numbers<[1], [0], [0], [1], [0, 0, 1, 1], [], []>} : vector<3x32xf32>, vector<32x128xf32>, vector<3x128xf32> -> vector<3x128xf32>
    %56 = vector.broadcast %30 : vector<3x1xf32> to vector<3x128xf32>
    %57 = arith.addf %55, %56 : vector<3x128xf32>
    %cst_51 = arith.constant 0.000000e+00 : f32
    %58 = vector.broadcast %cst_51 : f32 to vector<3x128xf32>
    %59 = arith.maximumf %57, %58 : vector<3x128xf32>
    %c6 = arith.constant 6 : index
    %c0_52 = arith.constant 0 : index
    %60 = vector.load %arg11[%c6, %c0_52] : memref<24x128xf32, #tpu.memory_space<vmem>>, vector<3x128xf32>
    tpu.vector_store %arg11[%c6, %c0_52], %59 {strides = array<i32>} : memref<24x128xf32, #tpu.memory_space<vmem>>, vector<3x128xf32>,
    %61 = vector.extract_strided_slice %27 {offsets = [96, 0], sizes = [32, 128], strides = [1, 1]} : vector<256x128xf32> to vector<32x128xf32>
    %62 = arith.addf %61, %28 : vector<32x128xf32>
    %cst_53 = arith.constant 0.000000e+00 : f32
    %63 = vector.broadcast %cst_53 : f32 to vector<32x128xf32>
    %64 = arith.maximumf %62, %63 : vector<32x128xf32>
    %cst_54 = arith.constant dense<0.000000e+00> : vector<3x128xf32>
    %65 = tpu.matmul %29, %64, %cst_54 {dimension_numbers = #tpu.dot_dimension_numbers<[1], [0], [0], [1], [0, 0, 1, 1], [], []>} : vector<3x32xf32>, vector<32x128xf32>, vector<3x128xf32> -> vector<3x128xf32>
    %66 = vector.broadcast %30 : vector<3x1xf32> to vector<3x128xf32>
    %67 = arith.addf %65, %66 : vector<3x128xf32>
    %cst_55 = arith.constant 0.000000e+00 : f32
    %68 = vector.broadcast %cst_55 : f32 to vector<3x128xf32>
    %69 = arith.maximumf %67, %68 : vector<3x128xf32>
    %c9 = arith.constant 9 : index
    %c0_56 = arith.constant 0 : index
    %70 = vector.load %arg11[%c9, %c0_56] : memref<24x128xf32, #tpu.memory_space<vmem>>, vector<3x128xf32>
    tpu.vector_store %arg11[%c9, %c0_56], %69 {strides = array<i32>} : memref<24x128xf32, #tpu.memory_space<vmem>>, vector<3x128xf32>,
    %71 = vector.extract_strided_slice %27 {offsets = [128, 0], sizes = [32, 128], strides = [1, 1]} : vector<256x128xf32> to vector<32x128xf32>
    %72 = arith.addf %71, %28 : vector<32x128xf32>
    %cst_57 = arith.constant 0.000000e+00 : f32
    %73 = vector.broadcast %cst_57 : f32 to vector<32x128xf32>
    %74 = arith.maximumf %72, %73 : vector<32x128xf32>
    %cst_58 = arith.constant dense<0.000000e+00> : vector<3x128xf32>
    %75 = tpu.matmul %29, %74, %cst_58 {dimension_numbers = #tpu.dot_dimension_numbers<[1], [0], [0], [1], [0, 0, 1, 1], [], []>} : vector<3x32xf32>, vector<32x128xf32>, vector<3x128xf32> -> vector<3x128xf32>
    %76 = vector.broadcast %30 : vector<3x1xf32> to vector<3x128xf32>
    %77 = arith.addf %75, %76 : vector<3x128xf32>
    %cst_59 = arith.constant 0.000000e+00 : f32
    %78 = vector.broadcast %cst_59 : f32 to vector<3x128xf32>
    %79 = arith.maximumf %77, %78 : vector<3x128xf32>
    %c12 = arith.constant 12 : index
    %c0_60 = arith.constant 0 : index
    %80 = vector.load %arg11[%c12, %c0_60] : memref<24x128xf32, #tpu.memory_space<vmem>>, vector<3x128xf32>
    tpu.vector_store %arg11[%c12, %c0_60], %79 {strides = array<i32>} : memref<24x128xf32, #tpu.memory_space<vmem>>, vector<3x128xf32>,
    %81 = vector.extract_strided_slice %27 {offsets = [160, 0], sizes = [32, 128], strides = [1, 1]} : vector<256x128xf32> to vector<32x128xf32>
    %82 = arith.addf %81, %28 : vector<32x128xf32>
    %cst_61 = arith.constant 0.000000e+00 : f32
    %83 = vector.broadcast %cst_61 : f32 to vector<32x128xf32>
    %84 = arith.maximumf %82, %83 : vector<32x128xf32>
    %cst_62 = arith.constant dense<0.000000e+00> : vector<3x128xf32>
    %85 = tpu.matmul %29, %84, %cst_62 {dimension_numbers = #tpu.dot_dimension_numbers<[1], [0], [0], [1], [0, 0, 1, 1], [], []>} : vector<3x32xf32>, vector<32x128xf32>, vector<3x128xf32> -> vector<3x128xf32>
    %86 = vector.broadcast %30 : vector<3x1xf32> to vector<3x128xf32>
    %87 = arith.addf %85, %86 : vector<3x128xf32>
    %cst_63 = arith.constant 0.000000e+00 : f32
    %88 = vector.broadcast %cst_63 : f32 to vector<3x128xf32>
    %89 = arith.maximumf %87, %88 : vector<3x128xf32>
    %c15 = arith.constant 15 : index
    %c0_64 = arith.constant 0 : index
    %90 = vector.load %arg11[%c15, %c0_64] : memref<24x128xf32, #tpu.memory_space<vmem>>, vector<3x128xf32>
    tpu.vector_store %arg11[%c15, %c0_64], %89 {strides = array<i32>} : memref<24x128xf32, #tpu.memory_space<vmem>>, vector<3x128xf32>,
    %91 = vector.extract_strided_slice %27 {offsets = [192, 0], sizes = [32, 128], strides = [1, 1]} : vector<256x128xf32> to vector<32x128xf32>
    %92 = arith.addf %91, %28 : vector<32x128xf32>
    %cst_65 = arith.constant 0.000000e+00 : f32
    %93 = vector.broadcast %cst_65 : f32 to vector<32x128xf32>
    %94 = arith.maximumf %92, %93 : vector<32x128xf32>
    %cst_66 = arith.constant dense<0.000000e+00> : vector<3x128xf32>
    %95 = tpu.matmul %29, %94, %cst_66 {dimension_numbers = #tpu.dot_dimension_numbers<[1], [0], [0], [1], [0, 0, 1, 1], [], []>} : vector<3x32xf32>, vector<32x128xf32>, vector<3x128xf32> -> vector<3x128xf32>
    %96 = vector.broadcast %30 : vector<3x1xf32> to vector<3x128xf32>
    %97 = arith.addf %95, %96 : vector<3x128xf32>
    %cst_67 = arith.constant 0.000000e+00 : f32
    %98 = vector.broadcast %cst_67 : f32 to vector<3x128xf32>
    %99 = arith.maximumf %97, %98 : vector<3x128xf32>
    %c18 = arith.constant 18 : index
    %c0_68 = arith.constant 0 : index
    %100 = vector.load %arg11[%c18, %c0_68] : memref<24x128xf32, #tpu.memory_space<vmem>>, vector<3x128xf32>
    tpu.vector_store %arg11[%c18, %c0_68], %99 {strides = array<i32>} : memref<24x128xf32, #tpu.memory_space<vmem>>, vector<3x128xf32>,
    %101 = vector.extract_strided_slice %27 {offsets = [224, 0], sizes = [32, 128], strides = [1, 1]} : vector<256x128xf32> to vector<32x128xf32>
    %102 = arith.addf %101, %28 : vector<32x128xf32>
    %cst_69 = arith.constant 0.000000e+00 : f32
    %103 = vector.broadcast %cst_69 : f32 to vector<32x128xf32>
    %104 = arith.maximumf %102, %103 : vector<32x128xf32>
    %cst_70 = arith.constant dense<0.000000e+00> : vector<3x128xf32>
    %105 = tpu.matmul %29, %104, %cst_70 {dimension_numbers = #tpu.dot_dimension_numbers<[1], [0], [0], [1], [0, 0, 1, 1], [], []>} : vector<3x32xf32>, vector<32x128xf32>, vector<3x128xf32> -> vector<3x128xf32>
    %106 = vector.broadcast %30 : vector<3x1xf32> to vector<3x128xf32>
    %107 = arith.addf %105, %106 : vector<3x128xf32>
    %cst_71 = arith.constant 0.000000e+00 : f32
    %108 = vector.broadcast %cst_71 : f32 to vector<3x128xf32>
    %109 = arith.maximumf %107, %108 : vector<3x128xf32>
    %c21 = arith.constant 21 : index
    %c0_72 = arith.constant 0 : index
    %110 = vector.load %arg11[%c21, %c0_72] : memref<24x128xf32, #tpu.memory_space<vmem>>, vector<3x128xf32>
    tpu.vector_store %arg11[%c21, %c0_72], %109 {strides = array<i32>} : memref<24x128xf32, #tpu.memory_space<vmem>>, vector<3x128xf32>,
    %c0_73 = arith.constant 0 : index
    %c0_74 = arith.constant 0 : index
    %111 = vector.load %arg11[%c0_73, %c0_74] : memref<24x128xf32, #tpu.memory_space<vmem>>, vector<24x128xf32>
    %c0_75 = arith.constant 0 : index
    %c0_76 = arith.constant 0 : index
    %112 = vector.load %arg7[%c0_75, %c0_76] : memref<128x128xf32, #tpu.memory_space<vmem>>, vector<128x128xf32>
    %cst_77 = arith.constant dense<0.000000e+00> : vector<24x128xf32>
    %113 = tpu.matmul %111, %112, %cst_77 {dimension_numbers = #tpu.dot_dimension_numbers<[1], [0], [0], [1], [0, 0, 1, 1], [], []>} : vector<24x128xf32>, vector<128x128xf32>, vector<24x128xf32> -> vector<24x128xf32>
    %c0_78 = arith.constant 0 : index
    %c0_79 = arith.constant 0 : index
    %114 = vector.load %arg8[%c0_78, %c0_79] : memref<1x128xf32, #tpu.memory_space<vmem>>, vector<1x128xf32>
    %115 = vector.broadcast %114 : vector<1x128xf32> to vector<24x128xf32>
    %116 = arith.addf %113, %115 : vector<24x128xf32>
    %117 = arith.negf %116 : vector<24x128xf32>
    %118 = math.exp %117 : vector<24x128xf32>
    %cst_80 = arith.constant 1.000000e+00 : f32
    %119 = vector.broadcast %cst_80 : f32 to vector<24x128xf32>
    %120 = arith.addf %119, %118 : vector<24x128xf32>
    %121 = arith.divf %119, %120 : vector<24x128xf32>
    %c0_81 = arith.constant 0 : index
    %c0_82 = arith.constant 0 : index
    %122 = vector.load %arg9[%c0_81, %c0_82] : memref<24x128xf32, #tpu.memory_space<vmem>>, vector<24x128xf32>
    tpu.vector_store %arg9[%c0_81, %c0_82], %121 {strides = array<i32>} : memref<24x128xf32, #tpu.memory_space<vmem>>, vector<24x128xf32>,
    return
  }
  func.func @transform_0(%arg0: i32) -> (i32, i32) {
    %c0_i32 = arith.constant 0 : i32
    %c0_i32_0 = arith.constant 0 : i32
    return %arg0, %c0_i32 : i32, i32
  }
  func.func @transform_1(%arg0: i32) -> (i32, i32) {
    %c0_i32 = arith.constant 0 : i32
    %c0_i32_0 = arith.constant 0 : i32
    %c0_i32_1 = arith.constant 0 : i32
    return %c0_i32, %c0_i32_0 : i32, i32
  }
  func.func @transform_2(%arg0: i32) -> (i32, i32) {
    %c0_i32 = arith.constant 0 : i32
    %c0_i32_0 = arith.constant 0 : i32
    %c0_i32_1 = arith.constant 0 : i32
    return %c0_i32, %c0_i32_0 : i32, i32
  }
  func.func @transform_3(%arg0: i32) -> (i32, i32) {
    %c0_i32 = arith.constant 0 : i32
    %c0_i32_0 = arith.constant 0 : i32
    %c0_i32_1 = arith.constant 0 : i32
    return %c0_i32, %c0_i32_0 : i32, i32
  }
  func.func @transform_4(%arg0: i32) -> (i32, i32) {
    %c0_i32 = arith.constant 0 : i32
    %c0_i32_0 = arith.constant 0 : i32
    %c0_i32_1 = arith.constant 0 : i32
    return %c0_i32, %c0_i32_0 : i32, i32
  }
  func.func @transform_5(%arg0: i32) -> (i32, i32) {
    %c0_i32 = arith.constant 0 : i32
    %c0_i32_0 = arith.constant 0 : i32
    %c0_i32_1 = arith.constant 0 : i32
    return %c0_i32, %c0_i32_0 : i32, i32
  }
  func.func @transform_6(%arg0: i32) -> (i32, i32) {
    %c0_i32 = arith.constant 0 : i32
    %c0_i32_0 = arith.constant 0 : i32
    %c0_i32_1 = arith.constant 0 : i32
    return %c0_i32, %c0_i32_0 : i32, i32
  }
  func.func @transform_7(%arg0: i32) -> (i32, i32) {
    %c0_i32 = arith.constant 0 : i32
    %c0_i32_0 = arith.constant 0 : i32
    %c0_i32_1 = arith.constant 0 : i32
    return %c0_i32, %c0_i32_0 : i32, i32
  }
  func.func @transform_8(%arg0: i32) -> (i32, i32) {
    %c0_i32 = arith.constant 0 : i32
    %c0_i32_0 = arith.constant 0 : i32
    return %arg0, %c0_i32 : i32, i32
  }
}

</mosaic_0001>

<llo_original>
// kernel: characteristic_line_reverser.1
$region0: #{characteristic_line_reverser.1}
  #allocation0 [shape = 'u32[]', space=smem, size = 0x4, offset = 0x4, fixed_abs, tag = 'smem constant byte address 0x4 - core index']
  #allocation1 [shape = 'u32[72,128]{1,0:T(1,128)}', space=vmem, size = 0x9000, scoped, tag = 'internal scratch']
  #allocation2 [shape = 'f32[256,64]{1,0:T(8,128)}', space=vmem, size = 0x20000, scoped, tag = 'scratch operand']
  #allocation3 [shape = 'f32[24,128]{1,0:T(8,128)}', space=vmem, size = 0x3000, scoped, tag = 'scratch operand']
  %s0 = inlined_call_operand.hbm [shape: f32[1024,64], index: 0, kind: input, shape index: {}]
  %s1 = inlined_call_operand.hbm [shape: f32[32,64], index: 1, kind: input, shape index: {}]
  %s2 = inlined_call_operand.hbm [shape: f32[64,128], index: 2, kind: input, shape index: {}]
  %s3 = inlined_call_operand.hbm [shape: f32[32,128], index: 3, kind: input, shape index: {}]
  %s4 = inlined_call_operand.vmem [shape: f32[3,32], index: 4, kind: input, shape index: {}]
  %s5 = inlined_call_operand.vmem [shape: f32[3,1], index: 5, kind: input, shape index: {}]
  %s6 = inlined_call_operand.hbm [shape: f32[128,128], index: 6, kind: input, shape index: {}]
  %s7 = inlined_call_operand.vmem [shape: f32[1,128], index: 7, kind: input, shape index: {}]
  %s8 = inlined_call_operand.vmem [shape: f32[48,128], index: 8, kind: output, shape index: {}]
  %s9 = sld [smem:[#allocation0]]
  $region85: #{characteristic_line_reverser.1} parent=0
    _
  %s11 = ssub.s32 1, %s9
  %s12 = scalar_select 0, %s11, %s9
  $region1: #{characteristic_line_reverser.1} parent=0
    #allocation4 [shape = 'u8[524288]{0}', space=vmem, size = 0x80000, scoped, tag = 'input window, operand 0']
    #allocation5 [shape = 's32[2]{0}', space=sflag, size = 0x8, scoped, tag = 'scoped memory for characteristic_line_reverser.1']
    #allocation6 [shape = 'u8[16384]{0}', space=vmem, size = 0x4000, scoped, tag = 'input window, operand 1, single buffered']
    #allocation7 [shape = 's32[1]{0}', space=sflag, size = 0x4, scoped, tag = 'scoped memory for characteristic_line_reverser.1']
    #allocation8 [shape = 'u8[32768]{0}', space=vmem, size = 0x8000, scoped, tag = 'input window, operand 2, single buffered']
    #allocation9 [shape = 'u8[16384]{0}', space=vmem, size = 0x4000, scoped, tag = 'input window, operand 3, single buffered']
    #allocation10 [shape = 's32[1]{0}', space=sflag, size = 0x4, scoped, tag = 'scoped memory for characteristic_line_reverser.1']
    #allocation11 [shape = 'u8[65536]{0}', space=vmem, size = 0x10000, scoped, tag = 'input window, operand 6, single buffered']
    %13 = vsyncpa [#allocation5], 0
    %s14 = scalar_lea.sflag [#allocation5], 1
    %15 = vsyncpa %s14, 0
    %16 = vsyncpa [#allocation7], 0
    %17 = vsyncpa [#allocation10], 0
    loop: start=0, step=1, limit=4
    $region2: #{characteristic_line_reverser.1} parent=1 // loop_pre_header
      _
    $region3: #{characteristic_line_reverser.1} parent=1 // loop_header
      %s19 = sphi 0, %s23
      %p20 = scmp.ge.s32.totalorder %s19, 4
      %s29 = sphi 0, %s31
      %s32 = sphi 0, %s29
      %s33 = sphi 0, %s32
      %s49 = sphi 0, %s33
      %s53 = sphi 0, %s53
      %s55 = sphi 0, %s53
      %s56 = sphi 0, %s55
      %s70 = sphi 0, %s56
      %s74 = sphi 0, %s74
      %s76 = sphi 0, %s74
      %s77 = sphi 0, %s76
      %s91 = sphi 0, %s77
      %s95 = sphi 0, %s95
      %s97 = sphi 0, %s95
      %s98 = sphi 0, %s97
      %s112 = sphi 0, %s98
      %s116 = sphi 0, %s116
      %s118 = sphi 0, %s116
      %s119 = sphi 0, %s118
      %s133 = sphi 0, %s119
      %s137 = sphi 0, %s137
      %s139 = sphi 0, %s137
      %s140 = sphi 0, %s139
      %s154 = sphi 0, %s140
      %s158 = sphi 0, %s158
      %s160 = sphi 0, %s158
      %s161 = sphi 0, %s160
      %s175 = sphi 0, %s161
      %s179 = sphi 0, %s179
      %s181 = sphi 0, %s179
      %s182 = sphi 0, %s181
      %s196 = sphi 0, %s182
      %s202 = sphi 0, %s204
      %s205 = sphi 0, %s202
      %s206 = sphi 0, %s205
      %s222 = sphi 0, %s206
    $region4: #{characteristic_line_reverser.1} parent=1 // loop_header_branch
      %22 = sbr.rel (%p20) target = $region8
    $region5: #{characteristic_line_reverser.1} parent=1 // loop_body
      %s24 = ssub.s32 %s19, 1
      %s25 = ssub.s32 %s19, 2
      %s26 = sadd.s32 %s19, 1
      %s27 = ssub.s32 %s19, %s26
      %p28 = scmp.eq.s32.totalorder %s27, 0
      %s30 = sadd.s32 %s29, 1
      %s31 = scalar_select %p28, %s29, %s30
      %p34 = pneg %p28
      %p35 = scmp.eq.s32.totalorder %s19, 1
      %p36 = por %p34, %p35
      %p37 = scmp.ne.s32.totalorder %s29, %s32
      %p38 = scmp.eq.s32.totalorder %s19, 0
      %p39 = por %p37, %p38
      %p40 = scmp.ne.s32.totalorder %s29, %s32
      %p41 = scmp.eq.s32.totalorder %s24, 1
      %p42 = por %p40, %p41
      %p43 = scmp.ne.s32.totalorder %s32, %s33
      %p44 = scmp.eq.s32.totalorder %s24, 0
      %p45 = por %p43, %p44
      %p46 = scmp.ne.s32.totalorder %s32, %s33
      %p47 = scmp.eq.s32.totalorder %s25, 1
      %p48 = por %p46, %p47
      %p50 = scmp.ne.s32.totalorder %s33, %s49
      %p51 = scmp.eq.s32.totalorder %s25, 0
      %p52 = por %p50, %p51
      %s54 = sadd.s32 %s53, 1
      %p57 = scmp.eq.s32.totalorder %s19, 1
      %p58 = scmp.ne.s32.totalorder %s53, %s55
      %p59 = scmp.eq.s32.totalorder %s19, 0
      %p60 = por %p58, %p59
      %p61 = scmp.ne.s32.totalorder %s53, %s55
      %p62 = scmp.eq.s32.totalorder %s24, 1
      %p63 = por %p61, %p62
      %p64 = scmp.ne.s32.totalorder %s55, %s56
      %p65 = scmp.eq.s32.totalorder %s24, 0
      %p66 = por %p64, %p65
      %p67 = scmp.ne.s32.totalorder %s55, %s56
      %p68 = scmp.eq.s32.totalorder %s25, 1
      %p69 = por %p67, %p68
      %p71 = scmp.ne.s32.totalorder %s56, %s70
      %p72 = scmp.eq.s32.totalorder %s25, 0
      %p73 = por %p71, %p72
      %s75 = sadd.s32 %s74, 1
      %p78 = scmp.eq.s32.totalorder %s19, 1
      %p79 = scmp.ne.s32.totalorder %s74, %s76
      %p80 = scmp.eq.s32.totalorder %s19, 0
      %p81 = por %p79, %p80
      %p82 = scmp.ne.s32.totalorder %s74, %s76
      %p83 = scmp.eq.s32.totalorder %s24, 1
      %p84 = por %p82, %p83
      %p85 = scmp.ne.s32.totalorder %s76, %s77
      %p86 = scmp.eq.s32.totalorder %s24, 0
      %p87 = por %p85, %p86
      %p88 = scmp.ne.s32.totalorder %s76, %s77
      %p89 = scmp.eq.s32.totalorder %s25, 1
      %p90 = por %p88, %p89
      %p92 = scmp.ne.s32.totalorder %s77, %s91
      %p93 = scmp.eq.s32.totalorder %s25, 0
      %p94 = por %p92, %p93
      %s96 = sadd.s32 %s95, 1
      %p99 = scmp.eq.s32.totalorder %s19, 1
      %p100 = scmp.ne.s32.totalorder %s95, %s97
      %p101 = scmp.eq.s32.totalorder %s19, 0
      %p102 = por %p100, %p101
      %p103 = scmp.ne.s32.totalorder %s95, %s97
      %p104 = scmp.eq.s32.totalorder %s24, 1
      %p105 = por %p103, %p104
      %p106 = scmp.ne.s32.totalorder %s97, %s98
      %p107 = scmp.eq.s32.totalorder %s24, 0
      %p108 = por %p106, %p107
      %p109 = scmp.ne.s32.totalorder %s97, %s98
      %p110 = scmp.eq.s32.totalorder %s25, 1
      %p111 = por %p109, %p110
      %p113 = scmp.ne.s32.totalorder %s98, %s112
      %p114 = scmp.eq.s32.totalorder %s25, 0
      %p115 = por %p113, %p114
      %s117 = sadd.s32 %s116, 1
      %p120 = scmp.eq.s32.totalorder %s19, 1
      %p121 = scmp.ne.s32.totalorder %s116, %s118
      %p122 = scmp.eq.s32.totalorder %s19, 0
      %p123 = por %p121, %p122
      %p124 = scmp.ne.s32.totalorder %s116, %s118
      %p125 = scmp.eq.s32.totalorder %s24, 1
      %p126 = por %p124, %p125
      %p127 = scmp.ne.s32.totalorder %s118, %s119
      %p128 = scmp.eq.s32.totalorder %s24, 0
      %p129 = por %p127, %p128
      %p130 = scmp.ne.s32.totalorder %s118, %s119
      %p131 = scmp.eq.s32.totalorder %s25, 1
      %p132 = por %p130, %p131
      %p134 = scmp.ne.s32.totalorder %s119, %s133
      %p135 = scmp.eq.s32.totalorder %s25, 0
      %p136 = por %p134, %p135
      %s138 = sadd.s32 %s137, 1
      %p141 = scmp.eq.s32.totalorder %s19, 1
      %p142 = scmp.ne.s32.totalorder %s137, %s139
      %p143 = scmp.eq.s32.totalorder %s19, 0
      %p144 = por %p142, %p143
      %p145 = scmp.ne.s32.totalorder %s137, %s139
      %p146 = scmp.eq.s32.totalorder %s24, 1
      %p147 = por %p145, %p146
      %p148 = scmp.ne.s32.totalorder %s139, %s140
      %p149 = scmp.eq.s32.totalorder %s24, 0
      %p150 = por %p148, %p149
      %p151 = scmp.ne.s32.totalorder %s139, %s140
      %p152 = scmp.eq.s32.totalorder %s25, 1
      %p153 = por %p151, %p152
      %p155 = scmp.ne.s32.totalorder %s140, %s154
      %p156 = scmp.eq.s32.totalorder %s25, 0
      %p157 = por %p155, %p156
      %s159 = sadd.s32 %s158, 1
      %p162 = scmp.eq.s32.totalorder %s19, 1
      %p163 = scmp.ne.s32.totalorder %s158, %s160
      %p164 = scmp.eq.s32.totalorder %s19, 0
      %p165 = por %p163, %p164
      %p166 = scmp.ne.s32.totalorder %s158, %s160
      %p167 = scmp.eq.s32.totalorder %s24, 1
      %p168 = por %p166, %p167
      %p169 = scmp.ne.s32.totalorder %s160, %s161
      %p170 = scmp.eq.s32.totalorder %s24, 0
      %p171 = por %p169, %p170
      %p172 = scmp.ne.s32.totalorder %s160, %s161
      %p173 = scmp.eq.s32.totalorder %s25, 1
      %p174 = por %p172, %p173
      %p176 = scmp.ne.s32.totalorder %s161, %s175
      %p177 = scmp.eq.s32.totalorder %s25, 0
      %p178 = por %p176, %p177
      %s180 = sadd.s32 %s179, 1
      %p183 = scmp.eq.s32.totalorder %s19, 1
      %p184 = scmp.ne.s32.totalorder %s179, %s181
      %p185 = scmp.eq.s32.totalorder %s19, 0
      %p186 = por %p184, %p185
      %p187 = scmp.ne.s32.totalorder %s179, %s181
      %p188 = scmp.eq.s32.totalorder %s24, 1
      %p189 = por %p187, %p188
      %p190 = scmp.ne.s32.totalorder %s181, %s182
      %p191 = scmp.eq.s32.totalorder %s24, 0
      %p192 = por %p190, %p191
      %p193 = scmp.ne.s32.totalorder %s181, %s182
      %p194 = scmp.eq.s32.totalorder %s25, 1
      %p195 = por %p193, %p194
      %p197 = scmp.ne.s32.totalorder %s182, %s196
      %p198 = scmp.eq.s32.totalorder %s25, 0
      %p199 = por %p197, %p198
      %s200 = ssub.s32 %s19, %s26
      %p201 = scmp.eq.s32.totalorder %s200, 0
      %s203 = sadd.s32 %s202, 1
      %s204 = scalar_select %p201, %s202, %s203
      %p207 = pneg %p201
      %p208 = scmp.eq.s32.totalorder %s19, 1
      %p209 = por %p207, %p208
      %p210 = scmp.ne.s32.totalorder %s202, %s205
      %p211 = scmp.eq.s32.totalorder %s19, 0
      %p212 = por %p210, %p211
      %p213 = scmp.ne.s32.totalorder %s202, %s205
      %p214 = scmp.eq.s32.totalorder %s24, 1
      %p215 = por %p213, %p214
      %p216 = scmp.ne.s32.totalorder %s205, %s206
      %p217 = scmp.eq.s32.totalorder %s24, 0
      %p218 = por %p216, %p217
      %p219 = scmp.ne.s32.totalorder %s205, %s206
      %p220 = scmp.eq.s32.totalorder %s25, 1
      %p221 = por %p219, %p220
      %p223 = scmp.ne.s32.totalorder %s206, %s222
      %p224 = scmp.eq.s32.totalorder %s25, 0
      %p225 = por %p223, %p224
      %p226 = scmp.le.s32.totalorder 1, %s19
      %p227 = scmp.lt.s32.totalorder %s19, 3
      %p228 = pnand %p226, %p227
      %p229 = pneg %p228
      // Predicated region
      $region9: #{characteristic_line_reverser.1} parent=5 // pred_check
        _
      $region10: #{characteristic_line_reverser.1} parent=5 // pred_check_branch
        %231 = sbr.rel (%p228) target = $region12
      $region11: #{characteristic_line_reverser.1} parent=5 // pred_region
        %s232 = ssub.s32 %s19, 1
        // Predicated region
        $region13: #{characteristic_line_reverser.1} parent=11 // pred_check
          %p233 = pneg %p66
        $region14: #{characteristic_line_reverser.1} parent=11 // pred_check_branch
          %235 = sbr.rel (%p233) target = $region16
        $region15: #{characteristic_line_reverser.1} parent=11 // pred_region
          %237 = vsyncadd [#allocation7], 0
          %s238 = sshll.u32 %s1, 4
          %s239 = int_to_ptr.hbm [resolvable:$true] %s238
          %s240 = sshll.u32 [#allocation6], 4
          %s241 = int_to_ptr.vmem [resolvable:$true] %s240
          %246 = dma.hbm_to_vmem [thread:$0]  %s239, 512, %s241, [#allocation7], 128, 128, 8
        $region16: #{characteristic_line_reverser.1} parent=11 // pred_fallthru
          _
        // Predicated region
        $region17: #{characteristic_line_reverser.1} parent=11 // pred_check
          %p247 = pneg %p87
        $region18: #{characteristic_line_reverser.1} parent=11 // pred_check_branch
          %249 = sbr.rel (%p247) target = $region20
        $region19: #{characteristic_line_reverser.1} parent=11 // pred_region
          %251 = vsyncadd [#allocation7], 0
          %s252 = sshll.u32 %s2, 4
          %s253 = int_to_ptr.hbm [resolvable:$true] %s252
          %s254 = sshll.u32 [#allocation8], 4
          %s255 = int_to_ptr.vmem [resolvable:$true] %s254
          %260 = dma.hbm_to_vmem [thread:$0]  %s253, 1024, %s255, [#allocation7], 128, 128, 8
        $region20: #{characteristic_line_reverser.1} parent=11 // pred_fallthru
          _
        // Predicated region
        $region21: #{characteristic_line_reverser.1} parent=11 // pred_check
          %p261 = pneg %p108
        $region22: #{characteristic_line_reverser.1} parent=11 // pred_check_branch
          %263 = sbr.rel (%p261) target = $region24
        $region23: #{characteristic_line_reverser.1} parent=11 // pred_region
          %265 = vsyncadd [#allocation10], 0
          %s266 = sshll.u32 %s3, 4
          %s267 = int_to_ptr.hbm [resolvable:$true] %s266
          %s268 = sshll.u32 [#allocation9], 4
          %s269 = int_to_ptr.vmem [resolvable:$true] %s268
          %274 = dma.hbm_to_vmem [thread:$0]  %s267, 512, %s269, [#allocation10], 128, 128, 8
        $region24: #{characteristic_line_reverser.1} parent=11 // pred_fallthru
          _
        // Predicated region
        $region25: #{characteristic_line_reverser.1} parent=11 // pred_check
          %p275 = pneg %p129
        $region26: #{characteristic_line_reverser.1} parent=11 // pred_check_branch
          %277 = sbr.rel (%p275) target = $region28
        $region27: #{characteristic_line_reverser.1} parent=11 // pred_region
          _
        $region28: #{characteristic_line_reverser.1} parent=11 // pred_fallthru
          _
        // Predicated region
        $region29: #{characteristic_line_reverser.1} parent=11 // pred_check
          %p278 = pneg %p150
        $region30: #{characteristic_line_reverser.1} parent=11 // pred_check_branch
          %280 = sbr.rel (%p278) target = $region32
        $region31: #{characteristic_line_reverser.1} parent=11 // pred_region
          _
        $region32: #{characteristic_line_reverser.1} parent=11 // pred_fallthru
          _
        // Predicated region
        $region33: #{characteristic_line_reverser.1} parent=11 // pred_check
          %p281 = pneg %p171
        $region34: #{characteristic_line_reverser.1} parent=11 // pred_check_branch
          %283 = sbr.rel (%p281) target = $region36
        $region35: #{characteristic_line_reverser.1} parent=11 // pred_region
          %285 = vsyncadd [#allocation10], 0
          %s286 = sshll.u32 %s6, 4
          %s287 = int_to_ptr.hbm [resolvable:$true] %s286
          %s288 = sshll.u32 [#allocation11], 4
          %s289 = int_to_ptr.vmem [resolvable:$true] %s288
          %294 = dma.hbm_to_vmem [thread:$0]  %s287, 2048, %s289, [#allocation10], 128, 128, 8
        $region36: #{characteristic_line_reverser.1} parent=11 // pred_fallthru
          _
        // Predicated region
        $region37: #{characteristic_line_reverser.1} parent=11 // pred_check
          %p295 = pneg %p192
        $region38: #{characteristic_line_reverser.1} parent=11 // pred_check_branch
          %297 = sbr.rel (%p295) target = $region40
        $region39: #{characteristic_line_reverser.1} parent=11 // pred_region
          _
        $region40: #{characteristic_line_reverser.1} parent=11 // pred_fallthru
          _
      $region12: #{characteristic_line_reverser.1} parent=5 // pred_fallthru
        _
      %p298 = scmp.lt.s32.totalorder %s19, 2
      // Predicated region
      $region41: #{characteristic_line_reverser.1} parent=5 // pred_check
        %p299 = pneg %p298
      $region42: #{characteristic_line_reverser.1} parent=5 // pred_check_branch
        %301 = sbr.rel (%p299) target = $region44
      $region43: #{characteristic_line_reverser.1} parent=5 // pred_region
        // Predicated region
        $region45: #{characteristic_line_reverser.1} parent=43 // pred_check
          %p302 = pneg %p39
        $region46: #{characteristic_line_reverser.1} parent=43 // pred_check_branch
          %304 = sbr.rel (%p302) target = $region48
        $region47: #{characteristic_line_reverser.1} parent=43 // pred_region
          %s305 = sand.u32 %s29, 1
          %s306 = scalar_lea.sflag [#allocation5], %s305
          %s307 = sand.u32 %s29, 1
          %s308 = smul.addr %s307, 512
          %s309 = scalar_lea.vmem [#allocation4], %s308
          %s310 = smul.u32 64, %s19
          %312 = vsyncadd %s306, 0
          %s313 = smul.addr %s310, 8
          %s314 = scalar_lea.hbm %s0, %s313
          %s315 = sshll.u32 %s314, 4
          %s316 = int_to_ptr.hbm [resolvable:$true] %s315
          %s317 = sshll.u32 %s309, 4
          %s318 = int_to_ptr.vmem [resolvable:$true] %s317
          %323 = dma.hbm_to_vmem [thread:$0]  %s316, 8192, %s318, %s306, 128, 128, 8
        $region48: #{characteristic_line_reverser.1} parent=43 // pred_fallthru
          _
      $region44: #{characteristic_line_reverser.1} parent=5 // pred_fallthru
        _
      %p324 = scmp.le.s32.totalorder 1, %s19
      %p325 = scmp.lt.s32.totalorder %s19, 3
      %p326 = pnand %p324, %p325
      %p327 = pneg %p326
      // Predicated region
      $region49: #{characteristic_line_reverser.1} parent=5 // pred_check
        _
      $region50: #{characteristic_line_reverser.1} parent=5 // pred_check_branch
        %329 = sbr.rel (%p326) target = $region52
      $region51: #{characteristic_line_reverser.1} parent=5 // pred_region
        %s330 = ssub.s32 %s19, 1
        %s331 = sand.u32 %s32, 1
        %s332 = scalar_lea.sflag [#allocation5], %s331
        %s333 = sand.u32 %s32, 1
        %s334 = smul.addr %s333, 512
        %s335 = scalar_lea.vmem [#allocation4], %s334
        // Predicated region
        $region53: #{characteristic_line_reverser.1} parent=51 // pred_check
          %p336 = pneg %p45
        $region54: #{characteristic_line_reverser.1} parent=51 // pred_check_branch
          %338 = sbr.rel (%p336) target = $region56
        $region55: #{characteristic_line_reverser.1} parent=51 // pred_region
          %340 = dma.done %s332, 8192
        $region56: #{characteristic_line_reverser.1} parent=51 // pred_fallthru
          _
        // Predicated region
        $region57: #{characteristic_line_reverser.1} parent=51 // pred_check
          %p341 = pneg %p66
        $region58: #{characteristic_line_reverser.1} parent=51 // pred_check_branch
          %343 = sbr.rel (%p341) target = $region60
        $region59: #{characteristic_line_reverser.1} parent=51 // pred_region
          %345 = dma.done [#allocation7], 512
        $region60: #{characteristic_line_reverser.1} parent=51 // pred_fallthru
          _
        // Predicated region
        $region61: #{characteristic_line_reverser.1} parent=51 // pred_check
          %p346 = pneg %p87
        $region62: #{characteristic_line_reverser.1} parent=51 // pred_check_branch
          %348 = sbr.rel (%p346) target = $region64
        $region63: #{characteristic_line_reverser.1} parent=51 // pred_region
          %350 = dma.done [#allocation7], 1024
        $region64: #{characteristic_line_reverser.1} parent=51 // pred_fallthru
          _
        // Predicated region
        $region65: #{characteristic_line_reverser.1} parent=51 // pred_check
          %p351 = pneg %p108
        $region66: #{characteristic_line_reverser.1} parent=51 // pred_check_branch
          %353 = sbr.rel (%p351) target = $region68
        $region67: #{characteristic_line_reverser.1} parent=51 // pred_region
          %355 = dma.done [#allocation10], 512
        $region68: #{characteristic_line_reverser.1} parent=51 // pred_fallthru
          _
        // Predicated region
        $region69: #{characteristic_line_reverser.1} parent=51 // pred_check
          %p356 = pneg %p171
        $region70: #{characteristic_line_reverser.1} parent=51 // pred_check_branch
          %358 = sbr.rel (%p356) target = $region72
        $region71: #{characteristic_line_reverser.1} parent=51 // pred_region
          %360 = dma.done [#allocation10], 2048
        $region72: #{characteristic_line_reverser.1} parent=51 // pred_fallthru
          _
        %s361 = sand.u32 %s32, 1
        %s362 = scalar_lea.sflag [#allocation5], %s361
        %s363 = sand.u32 %s32, 1
        %s364 = smul.addr %s363, 512
        %s365 = scalar_lea.vmem [#allocation4], %s364
        %p366 = pneg %p45
        %p367 = pneg %p42
        %p368 = pneg %p66
        %p369 = pneg %p63
        %p370 = pneg %p87
        %p371 = pneg %p84
        %p372 = pneg %p108
        %p373 = pneg %p105
        %p374 = pneg %p129
        %p375 = pneg %p126
        %p376 = pneg %p150
        %p377 = pneg %p147
        %p378 = pneg %p171
        %p379 = pneg %p168
        %p380 = pneg %p192
        %p381 = pneg %p189
        %p382 = pneg %p218
        %p383 = pneg %p215
        %s384 = smul.u32 3, %s24
        %p385 = scmp.lt.s32.totalorder %s384, 5
        %s386 = scalar_select %p385, %s384, 5
        %s387 = smul.addr %s386, 8
        %s388 = scalar_lea.vmem %s8, %s387
        %s389 = smul.u32 64, %s24
        %s390 = smul.u32 3, %s24
        %p391 = scmp.lt.s32.totalorder %s390, 5
        %s392 = scalar_select %p391, %s390, 5
        %s393 = smul.addr %s392, 8
        %s394 = scalar_lea.vmem %s8, %s393
        %s395 = smul.u32 3, %s24
        %v396 = vld [vmem:[#allocation6] sm:$0xff]
        %v397 = vld [vmem:[#allocation6 + $0x8] sm:$0xff]
        %v398 = vld [vmem:[#allocation6 + $0x10] sm:$0xff]
        %v399 = vld [vmem:[#allocation6 + $0x18] sm:$0xff]
        %v400 = vld [vmem:[%s335] sm:$0xff]
        %v401 = vld [vmem:[%s335 + $0x8] sm:$0xff]
        %v402 = vld [vmem:[%s335 + $0x10] sm:$0xff]
        %v403 = vld [vmem:[%s335 + $0x18] sm:$0xff]
        %v404 = vld [vmem:[%s335 + $0x20] sm:$0xff]
        %v405 = vld [vmem:[%s335 + $0x28] sm:$0xff]
        %v406 = vld [vmem:[%s335 + $0x30] sm:$0xff]
        %v407 = vld [vmem:[%s335 + $0x38] sm:$0xff]
        %vm408 = vcmask 523264
        %v410 = vsel %vm408, %v396, 0
        %v413 = vsel %vm408, %v397, 0
        %v416 = vsel %vm408, %v398, 0
        %v419 = vsel %vm408, %v399, 0
        %v422 = vsel %vm408, %v400, 0
        %v425 = vsel %vm408, %v401, 0
        %v428 = vsel %vm408, %v402, 0
        %v431 = vsel %vm408, %v403, 0
        %v434 = vsel %vm408, %v404, 0
        %v437 = vsel %vm408, %v405, 0
        %v440 = vsel %vm408, %v406, 0
        %v443 = vsel %vm408, %v407, 0
        %445 = vmatpush.xpose.msra.mxu0 0.0
        %446 = vmatpush.xpose.msra.mxu0 0.0
        %447 = vmatpush.xpose.msra.mxu0 0.0
        %448 = vmatpush.xpose.msra.mxu0 0.0
        %449 = vmatpush.xpose.msra.mxu0 0.0
        %450 = vmatpush.xpose.msra.mxu0 0.0
        %451 = vmatpush.xpose.msra.mxu0 0.0
        %452 = vmatpush.xpose.msra.mxu0 0.0
        %453 = vmatpush.xpose.msra.mxu0 %v443
        %454 = vmatpush.xpose.msra.mxu0 %v440
        %455 = vmatpush.xpose.msra.mxu0 %v437
        %456 = vmatpush.xpose.msra.mxu0 %v434
        %457 = vmatpush.xpose.msra.mxu0 %v431
        %458 = vmatpush.xpose.msra.mxu0 %v428
        %459 = vmatpush.xpose.msra.mxu0 %v425
        %460 = vmatpush.xpose.msra.mxu0 %v422
        %461 = vmatmul.f32.gmra.mxu0 %v410
        %v462 = vpop.f32.mrf.mxu0
        %v463 = vadd.f32 0.0, %v462
        %464 = vmatmul.f32.gmra.mxu0 %v413
        %v465 = vpop.f32.mrf.mxu0
        %v466 = vadd.f32 0.0, %v465
        %467 = vmatmul.f32.gmra.mxu0 %v416
        %v468 = vpop.f32.mrf.mxu0
        %v469 = vadd.f32 0.0, %v468
        %470 = vmatmul.f32.gmra.mxu0 %v419
        %v471 = vpop.f32.mrf.mxu0
        %v472 = vadd.f32 0.0, %v471
        %473 = vdwg.mxu0
        %474 = vst.msk [vmem:[#allocation2] sm:$0xff] %vm408, %v463
        %475 = vst.msk [vmem:[#allocation2 + $0x8] sm:$0xff] %vm408, %v466
        %476 = vst.msk [vmem:[#allocation2 + $0x10] sm:$0xff] %vm408, %v469
        %477 = vst.msk [vmem:[#allocation2 + $0x18] sm:$0xff] %vm408, %v472
        %v478 = vld [vmem:[%s335 + $0x40] sm:$0xff]
        %v479 = vld [vmem:[%s335 + $0x48] sm:$0xff]
        %v480 = vld [vmem:[%s335 + $0x50] sm:$0xff]
        %v481 = vld [vmem:[%s335 + $0x58] sm:$0xff]
        %v482 = vld [vmem:[%s335 + $0x60] sm:$0xff]
        %v483 = vld [vmem:[%s335 + $0x68] sm:$0xff]
        %v484 = vld [vmem:[%s335 + $0x70] sm:$0xff]
        %v485 = vld [vmem:[%s335 + $0x78] sm:$0xff]
        %v487 = vsel %vm408, %v478, 0
        %v490 = vsel %vm408, %v479, 0
        %v493 = vsel %vm408, %v480, 0
        %v496 = vsel %vm408, %v481, 0
        %v499 = vsel %vm408, %v482, 0
        %v502 = vsel %vm408, %v483, 0
        %v505 = vsel %vm408, %v484, 0
        %v508 = vsel %vm408, %v485, 0
        %510 = vmatpush.xpose.msra.mxu0 0.0
        %511 = vmatpush.xpose.msra.mxu0 0.0
        %512 = vmatpush.xpose.msra.mxu0 0.0
        %513 = vmatpush.xpose.msra.mxu0 0.0
        %514 = vmatpush.xpose.msra.mxu0 0.0
        %515 = vmatpush.xpose.msra.mxu0 0.0
        %516 = vmatpush.xpose.msra.mxu0 0.0
        %517 = vmatpush.xpose.msra.mxu0 0.0
        %518 = vmatpush.xpose.msra.mxu0 %v508
        %519 = vmatpush.xpose.msra.mxu0 %v505
        %520 = vmatpush.xpose.msra.mxu0 %v502
        %521 = vmatpush.xpose.msra.mxu0 %v499
        %522 = vmatpush.xpose.msra.mxu0 %v496
        %523 = vmatpush.xpose.msra.mxu0 %v493
        %524 = vmatpush.xpose.msra.mxu0 %v490
        %525 = vmatpush.xpose.msra.mxu0 %v487
        %526 = vmatmul.f32.gmra.mxu0 %v410
        %v527 = vpop.f32.mrf.mxu0
        %v528 = vadd.f32 0.0, %v527
        %529 = vmatmul.f32.gmra.mxu0 %v413
        %v530 = vpop.f32.mrf.mxu0
        %v531 = vadd.f32 0.0, %v530
        %532 = vmatmul.f32.gmra.mxu0 %v416
        %v533 = vpop.f32.mrf.mxu0
        %v534 = vadd.f32 0.0, %v533
        %535 = vmatmul.f32.gmra.mxu0 %v419
        %v536 = vpop.f32.mrf.mxu0
        %v537 = vadd.f32 0.0, %v536
        %538 = vdwg.mxu0
        %539 = vst.msk [vmem:[#allocation2 + $0x20] sm:$0xff] %vm408, %v528
        %540 = vst.msk [vmem:[#allocation2 + $0x28] sm:$0xff] %vm408, %v531
        %541 = vst.msk [vmem:[#allocation2 + $0x30] sm:$0xff] %vm408, %v534
        %542 = vst.msk [vmem:[#allocation2 + $0x38] sm:$0xff] %vm408, %v537
        %v543 = vld [vmem:[%s335 + $0x80] sm:$0xff]
        %v544 = vld [vmem:[%s335 + $0x88] sm:$0xff]
        %v545 = vld [vmem:[%s335 + $0x90] sm:$0xff]
        %v546 = vld [vmem:[%s335 + $0x98] sm:$0xff]
        %v547 = vld [vmem:[%s335 + $0xa0] sm:$0xff]
        %v548 = vld [vmem:[%s335 + $0xa8] sm:$0xff]
        %v549 = vld [vmem:[%s335 + $0xb0] sm:$0xff]
        %v550 = vld [vmem:[%s335 + $0xb8] sm:$0xff]
        %v552 = vsel %vm408, %v543, 0
        %v555 = vsel %vm408, %v544, 0
        %v558 = vsel %vm408, %v545, 0
        %v561 = vsel %vm408, %v546, 0
        %v564 = vsel %vm408, %v547, 0
        %v567 = vsel %vm408, %v548, 0
        %v570 = vsel %vm408, %v549, 0
        %v573 = vsel %vm408, %v550, 0
        %575 = vmatpush.xpose.msra.mxu0 0.0
        %576 = vmatpush.xpose.msra.mxu0 0.0
        %577 = vmatpush.xpose.msra.mxu0 0.0
        %578 = vmatpush.xpose.msra.mxu0 0.0
        %579 = vmatpush.xpose.msra.mxu0 0.0
        %580 = vmatpush.xpose.msra.mxu0 0.0
        %581 = vmatpush.xpose.msra.mxu0 0.0
        %582 = vmatpush.xpose.msra.mxu0 0.0
        %583 = vmatpush.xpose.msra.mxu0 %v573
        %584 = vmatpush.xpose.msra.mxu0 %v570
        %585 = vmatpush.xpose.msra.mxu0 %v567
        %586 = vmatpush.xpose.msra.mxu0 %v564
        %587 = vmatpush.xpose.msra.mxu0 %v561
        %588 = vmatpush.xpose.msra.mxu0 %v558
        %589 = vmatpush.xpose.msra.mxu0 %v555
        %590 = vmatpush.xpose.msra.mxu0 %v552
        %591 = vmatmul.f32.gmra.mxu0 %v410
        %v592 = vpop.f32.mrf.mxu0
        %v593 = vadd.f32 0.0, %v592
        %594 = vmatmul.f32.gmra.mxu0 %v413
        %v595 = vpop.f32.mrf.mxu0
        %v596 = vadd.f32 0.0, %v595
        %597 = vmatmul.f32.gmra.mxu0 %v416
        %v598 = vpop.f32.mrf.mxu0
        %v599 = vadd.f32 0.0, %v598
        %600 = vmatmul.f32.gmra.mxu0 %v419
        %v601 = vpop.f32.mrf.mxu0
        %v602 = vadd.f32 0.0, %v601
        %603 = vdwg.mxu0
        %604 = vst.msk [vmem:[#allocation2 + $0x40] sm:$0xff] %vm408, %v593
        %605 = vst.msk [vmem:[#allocation2 + $0x48] sm:$0xff] %vm408, %v596
        %606 = vst.msk [vmem:[#allocation2 + $0x50] sm:$0xff] %vm408, %v599
        %607 = vst.msk [vmem:[#allocation2 + $0x58] sm:$0xff] %vm408, %v602
        %v608 = vld [vmem:[%s335 + $0xc0] sm:$0xff]
        %v609 = vld [vmem:[%s335 + $0xc8] sm:$0xff]
        %v610 = vld [vmem:[%s335 + $0xd0] sm:$0xff]
        %v611 = vld [vmem:[%s335 + $0xd8] sm:$0xff]
        %v612 = vld [vmem:[%s335 + $0xe0] sm:$0xff]
        %v613 = vld [vmem:[%s335 + $0xe8] sm:$0xff]
        %v614 = vld [vmem:[%s335 + $0xf0] sm:$0xff]
        %v615 = vld [vmem:[%s335 + $0xf8] sm:$0xff]
        %v617 = vsel %vm408, %v608, 0
        %v620 = vsel %vm408, %v609, 0
        %v623 = vsel %vm408, %v610, 0
        %v626 = vsel %vm408, %v611, 0
        %v629 = vsel %vm408, %v612, 0
        %v632 = vsel %vm408, %v613, 0
        %v635 = vsel %vm408, %v614, 0
        %v638 = vsel %vm408, %v615, 0
        %640 = vmatpush.xpose.msra.mxu0 0.0
        %641 = vmatpush.xpose.msra.mxu0 0.0
        %642 = vmatpush.xpose.msra.mxu0 0.0
        %643 = vmatpush.xpose.msra.mxu0 0.0
        %644 = vmatpush.xpose.msra.mxu0 0.0
        %645 = vmatpush.xpose.msra.mxu0 0.0
        %646 = vmatpush.xpose.msra.mxu0 0.0
        %647 = vmatpush.xpose.msra.mxu0 0.0
        %648 = vmatpush.xpose.msra.mxu0 %v638
        %649 = vmatpush.xpose.msra.mxu0 %v635
        %650 = vmatpush.xpose.msra.mxu0 %v632
        %651 = vmatpush.xpose.msra.mxu0 %v629
        %652 = vmatpush.xpose.msra.mxu0 %v626
        %653 = vmatpush.xpose.msra.mxu0 %v623
        %654 = vmatpush.xpose.msra.mxu0 %v620
        %655 = vmatpush.xpose.msra.mxu0 %v617
        %656 = vmatmul.f32.gmra.mxu0 %v410
        %v657 = vpop.f32.mrf.mxu0
        %v658 = vadd.f32 0.0, %v657
        %659 = vmatmul.f32.gmra.mxu0 %v413
        %v660 = vpop.f32.mrf.mxu0
        %v661 = vadd.f32 0.0, %v660
        %662 = vmatmul.f32.gmra.mxu0 %v416
        %v663 = vpop.f32.mrf.mxu0
        %v664 = vadd.f32 0.0, %v663
        %665 = vmatmul.f32.gmra.mxu0 %v419
        %v666 = vpop.f32.mrf.mxu0
        %v667 = vadd.f32 0.0, %v666
        %668 = vdwg.mxu0
        %669 = vst.msk [vmem:[#allocation2 + $0x60] sm:$0xff] %vm408, %v658
        %670 = vst.msk [vmem:[#allocation2 + $0x68] sm:$0xff] %vm408, %v661
        %671 = vst.msk [vmem:[#allocation2 + $0x70] sm:$0xff] %vm408, %v664
        %672 = vst.msk [vmem:[#allocation2 + $0x78] sm:$0xff] %vm408, %v667
        %v673 = vld [vmem:[%s335 + $0x100] sm:$0xff]
        %v674 = vld [vmem:[%s335 + $0x108] sm:$0xff]
        %v675 = vld [vmem:[%s335 + $0x110] sm:$0xff]
        %v676 = vld [vmem:[%s335 + $0x118] sm:$0xff]
        %v677 = vld [vmem:[%s335 + $0x120] sm:$0xff]
        %v678 = vld [vmem:[%s335 + $0x128] sm:$0xff]
        %v679 = vld [vmem:[%s335 + $0x130] sm:$0xff]
        %v680 = vld [vmem:[%s335 + $0x138] sm:$0xff]
        %v682 = vsel %vm408, %v673, 0
        %v685 = vsel %vm408, %v674, 0
        %v688 = vsel %vm408, %v675, 0
        %v691 = vsel %vm408, %v676, 0
        %v694 = vsel %vm408, %v677, 0
        %v697 = vsel %vm408, %v678, 0
        %v700 = vsel %vm408, %v679, 0
        %v703 = vsel %vm408, %v680, 0
        %705 = vmatpush.xpose.msra.mxu0 0.0
        %706 = vmatpush.xpose.msra.mxu0 0.0
        %707 = vmatpush.xpose.msra.mxu0 0.0
        %708 = vmatpush.xpose.msra.mxu0 0.0
        %709 = vmatpush.xpose.msra.mxu0 0.0
        %710 = vmatpush.xpose.msra.mxu0 0.0
        %711 = vmatpush.xpose.msra.mxu0 0.0
        %712 = vmatpush.xpose.msra.mxu0 0.0
        %713 = vmatpush.xpose.msra.mxu0 %v703
        %714 = vmatpush.xpose.msra.mxu0 %v700
        %715 = vmatpush.xpose.msra.mxu0 %v697
        %716 = vmatpush.xpose.msra.mxu0 %v694
        %717 = vmatpush.xpose.msra.mxu0 %v691
        %718 = vmatpush.xpose.msra.mxu0 %v688
        %719 = vmatpush.xpose.msra.mxu0 %v685
        %720 = vmatpush.xpose.msra.mxu0 %v682
        %721 = vmatmul.f32.gmra.mxu0 %v410
        %v722 = vpop.f32.mrf.mxu0
        %v723 = vadd.f32 0.0, %v722
        %724 = vmatmul.f32.gmra.mxu0 %v413
        %v725 = vpop.f32.mrf.mxu0
        %v726 = vadd.f32 0.0, %v725
        %727 = vmatmul.f32.gmra.mxu0 %v416
        %v728 = vpop.f32.mrf.mxu0
        %v729 = vadd.f32 0.0, %v728
        %730 = vmatmul.f32.gmra.mxu0 %v419
        %v731 = vpop.f32.mrf.mxu0
        %v732 = vadd.f32 0.0, %v731
        %733 = vdwg.mxu0
        %734 = vst.msk [vmem:[#allocation2 + $0x80] sm:$0xff] %vm408, %v723
        %735 = vst.msk [vmem:[#allocation2 + $0x88] sm:$0xff] %vm408, %v726
        %736 = vst.msk [vmem:[#allocation2 + $0x90] sm:$0xff] %vm408, %v729
        %737 = vst.msk [vmem:[#allocation2 + $0x98] sm:$0xff] %vm408, %v732
        %v738 = vld [vmem:[%s335 + $0x140] sm:$0xff]
        %v739 = vld [vmem:[%s335 + $0x148] sm:$0xff]
        %v740 = vld [vmem:[%s335 + $0x150] sm:$0xff]
        %v741 = vld [vmem:[%s335 + $0x158] sm:$0xff]
        %v742 = vld [vmem:[%s335 + $0x160] sm:$0xff]
        %v743 = vld [vmem:[%s335 + $0x168] sm:$0xff]
        %v744 = vld [vmem:[%s335 + $0x170] sm:$0xff]
        %v745 = vld [vmem:[%s335 + $0x178] sm:$0xff]
        %v747 = vsel %vm408, %v738, 0
        %v750 = vsel %vm408, %v739, 0
        %v753 = vsel %vm408, %v740, 0
        %v756 = vsel %vm408, %v741, 0
        %v759 = vsel %vm408, %v742, 0
        %v762 = vsel %vm408, %v743, 0
        %v765 = vsel %vm408, %v744, 0
        %v768 = vsel %vm408, %v745, 0
        %770 = vmatpush.xpose.msra.mxu0 0.0
        %771 = vmatpush.xpose.msra.mxu0 0.0
        %772 = vmatpush.xpose.msra.mxu0 0.0
        %773 = vmatpush.xpose.msra.mxu0 0.0
        %774 = vmatpush.xpose.msra.mxu0 0.0
        %775 = vmatpush.xpose.msra.mxu0 0.0
        %776 = vmatpush.xpose.msra.mxu0 0.0
        %777 = vmatpush.xpose.msra.mxu0 0.0
        %778 = vmatpush.xpose.msra.mxu0 %v768
        %779 = vmatpush.xpose.msra.mxu0 %v765
        %780 = vmatpush.xpose.msra.mxu0 %v762
        %781 = vmatpush.xpose.msra.mxu0 %v759
        %782 = vmatpush.xpose.msra.mxu0 %v756
        %783 = vmatpush.xpose.msra.mxu0 %v753
        %784 = vmatpush.xpose.msra.mxu0 %v750
        %785 = vmatpush.xpose.msra.mxu0 %v747
        %786 = vmatmul.f32.gmra.mxu0 %v410
        %v787 = vpop.f32.mrf.mxu0
        %v788 = vadd.f32 0.0, %v787
        %789 = vmatmul.f32.gmra.mxu0 %v413
        %v790 = vpop.f32.mrf.mxu0
        %v791 = vadd.f32 0.0, %v790
        %792 = vmatmul.f32.gmra.mxu0 %v416
        %v793 = vpop.f32.mrf.mxu0
        %v794 = vadd.f32 0.0, %v793
        %795 = vmatmul.f32.gmra.mxu0 %v419
        %v796 = vpop.f32.mrf.mxu0
        %v797 = vadd.f32 0.0, %v796
        %798 = vdwg.mxu0
        %799 = vst.msk [vmem:[#allocation2 + $0xa0] sm:$0xff] %vm408, %v788
        %800 = vst.msk [vmem:[#allocation2 + $0xa8] sm:$0xff] %vm408, %v791
        %801 = vst.msk [vmem:[#allocation2 + $0xb0] sm:$0xff] %vm408, %v794
        %802 = vst.msk [vmem:[#allocation2 + $0xb8] sm:$0xff] %vm408, %v797
        %v803 = vld [vmem:[%s335 + $0x180] sm:$0xff]
        %v804 = vld [vmem:[%s335 + $0x188] sm:$0xff]
        %v805 = vld [vmem:[%s335 + $0x190] sm:$0xff]
        %v806 = vld [vmem:[%s335 + $0x198] sm:$0xff]
        %v807 = vld [vmem:[%s335 + $0x1a0] sm:$0xff]
        %v808 = vld [vmem:[%s335 + $0x1a8] sm:$0xff]
        %v809 = vld [vmem:[%s335 + $0x1b0] sm:$0xff]
        %v810 = vld [vmem:[%s335 + $0x1b8] sm:$0xff]
        %v812 = vsel %vm408, %v803, 0
        %v815 = vsel %vm408, %v804, 0
        %v818 = vsel %vm408, %v805, 0
        %v821 = vsel %vm408, %v806, 0
        %v824 = vsel %vm408, %v807, 0
        %v827 = vsel %vm408, %v808, 0
        %v830 = vsel %vm408, %v809, 0
        %v833 = vsel %vm408, %v810, 0
        %835 = vmatpush.xpose.msra.mxu0 0.0
        %836 = vmatpush.xpose.msra.mxu0 0.0
        %837 = vmatpush.xpose.msra.mxu0 0.0
        %838 = vmatpush.xpose.msra.mxu0 0.0
        %839 = vmatpush.xpose.msra.mxu0 0.0
        %840 = vmatpush.xpose.msra.mxu0 0.0
        %841 = vmatpush.xpose.msra.mxu0 0.0
        %842 = vmatpush.xpose.msra.mxu0 0.0
        %843 = vmatpush.xpose.msra.mxu0 %v833
        %844 = vmatpush.xpose.msra.mxu0 %v830
        %845 = vmatpush.xpose.msra.mxu0 %v827
        %846 = vmatpush.xpose.msra.mxu0 %v824
        %847 = vmatpush.xpose.msra.mxu0 %v821
        %848 = vmatpush.xpose.msra.mxu0 %v818
        %849 = vmatpush.xpose.msra.mxu0 %v815
        %850 = vmatpush.xpose.msra.mxu0 %v812
        %851 = vmatmul.f32.gmra.mxu0 %v410
        %v852 = vpop.f32.mrf.mxu0
        %v853 = vadd.f32 0.0, %v852
        %854 = vmatmul.f32.gmra.mxu0 %v413
        %v855 = vpop.f32.mrf.mxu0
        %v856 = vadd.f32 0.0, %v855
        %857 = vmatmul.f32.gmra.mxu0 %v416
        %v858 = vpop.f32.mrf.mxu0
        %v859 = vadd.f32 0.0, %v858
        %860 = vmatmul.f32.gmra.mxu0 %v419
        %v861 = vpop.f32.mrf.mxu0
        %v862 = vadd.f32 0.0, %v861
        %863 = vdwg.mxu0
        %864 = vst.msk [vmem:[#allocation2 + $0xc0] sm:$0xff] %vm408, %v853
        %865 = vst.msk [vmem:[#allocation2 + $0xc8] sm:$0xff] %vm408, %v856
        %866 = vst.msk [vmem:[#allocation2 + $0xd0] sm:$0xff] %vm408, %v859
        %867 = vst.msk [vmem:[#allocation2 + $0xd8] sm:$0xff] %vm408, %v862
        %v868 = vld [vmem:[%s335 + $0x1c0] sm:$0xff]
        %v869 = vld [vmem:[%s335 + $0x1c8] sm:$0xff]
        %v870 = vld [vmem:[%s335 + $0x1d0] sm:$0xff]
        %v871 = vld [vmem:[%s335 + $0x1d8] sm:$0xff]
        %v872 = vld [vmem:[%s335 + $0x1e0] sm:$0xff]
        %v873 = vld [vmem:[%s335 + $0x1e8] sm:$0xff]
        %v874 = vld [vmem:[%s335 + $0x1f0] sm:$0xff]
        %v875 = vld [vmem:[%s335 + $0x1f8] sm:$0xff]
        %v877 = vsel %vm408, %v868, 0
        %v880 = vsel %vm408, %v869, 0
        %v883 = vsel %vm408, %v870, 0
        %v886 = vsel %vm408, %v871, 0
        %v889 = vsel %vm408, %v872, 0
        %v892 = vsel %vm408, %v873, 0
        %v895 = vsel %vm408, %v874, 0
        %v898 = vsel %vm408, %v875, 0
        %900 = vmatpush.xpose.msra.mxu0 0.0
        %901 = vmatpush.xpose.msra.mxu0 0.0
        %902 = vmatpush.xpose.msra.mxu0 0.0
        %903 = vmatpush.xpose.msra.mxu0 0.0
        %904 = vmatpush.xpose.msra.mxu0 0.0
        %905 = vmatpush.xpose.msra.mxu0 0.0
        %906 = vmatpush.xpose.msra.mxu0 0.0
        %907 = vmatpush.xpose.msra.mxu0 0.0
        %908 = vmatpush.xpose.msra.mxu0 %v898
        %909 = vmatpush.xpose.msra.mxu0 %v895
        %910 = vmatpush.xpose.msra.mxu0 %v892
        %911 = vmatpush.xpose.msra.mxu0 %v889
        %912 = vmatpush.xpose.msra.mxu0 %v886
        %913 = vmatpush.xpose.msra.mxu0 %v883
        %914 = vmatpush.xpose.msra.mxu0 %v880
        %915 = vmatpush.xpose.msra.mxu0 %v877
        %916 = vmatmul.f32.gmra.mxu0 %v410
        %v917 = vpop.f32.mrf.mxu0
        %v918 = vadd.f32 0.0, %v917
        %919 = vmatmul.f32.gmra.mxu0 %v413
        %v920 = vpop.f32.mrf.mxu0
        %v921 = vadd.f32 0.0, %v920
        %922 = vmatmul.f32.gmra.mxu0 %v416
        %v923 = vpop.f32.mrf.mxu0
        %v924 = vadd.f32 0.0, %v923
        %925 = vmatmul.f32.gmra.mxu0 %v419
        %v926 = vpop.f32.mrf.mxu0
        %v927 = vadd.f32 0.0, %v926
        %928 = vdwg.mxu0
        %929 = vst.msk [vmem:[#allocation2 + $0xe0] sm:$0xff] %vm408, %v918
        %930 = vst.msk [vmem:[#allocation2 + $0xe8] sm:$0xff] %vm408, %v921
        %931 = vst.msk [vmem:[#allocation2 + $0xf0] sm:$0xff] %vm408, %v924
        %932 = vst.msk [vmem:[#allocation2 + $0xf8] sm:$0xff] %vm408, %v927
        %v933 = vld [vmem:[#allocation2] sm:$0xff]
        %v934 = vld [vmem:[#allocation2 + $0x8] sm:$0xff]
        %v935 = vld [vmem:[#allocation2 + $0x10] sm:$0xff]
        %v936 = vld [vmem:[#allocation2 + $0x18] sm:$0xff]
        %v937 = vld [vmem:[#allocation2 + $0x20] sm:$0xff]
        %v938 = vld [vmem:[#allocation2 + $0x28] sm:$0xff]
        %v939 = vld [vmem:[#allocation2 + $0x30] sm:$0xff]
        %v940 = vld [vmem:[#allocation2 + $0x38] sm:$0xff]
        %v941 = vld [vmem:[#allocation2 + $0x40] sm:$0xff]
        %v942 = vld [vmem:[#allocation2 + $0x48] sm:$0xff]
        %v943 = vld [vmem:[#allocation2 + $0x50] sm:$0xff]
        %v944 = vld [vmem:[#allocation2 + $0x58] sm:$0xff]
        %v945 = vld [vmem:[#allocation2 + $0x60] sm:$0xff]
        %v946 = vld [vmem:[#allocation2 + $0x68] sm:$0xff]
        %v947 = vld [vmem:[#allocation2 + $0x70] sm:$0xff]
        %v948 = vld [vmem:[#allocation2 + $0x78] sm:$0xff]
        %v949 = vld [vmem:[#allocation2 + $0x80] sm:$0xff]
        %v950 = vld [vmem:[#allocation2 + $0x88] sm:$0xff]
        %v951 = vld [vmem:[#allocation2 + $0x90] sm:$0xff]
        %v952 = vld [vmem:[#allocation2 + $0x98] sm:$0xff]
        %v953 = vld [vmem:[#allocation2 + $0xa0] sm:$0xff]
        %v954 = vld [vmem:[#allocation2 + $0xa8] sm:$0xff]
        %v955 = vld [vmem:[#allocation2 + $0xb0] sm:$0xff]
        %v956 = vld [vmem:[#allocation2 + $0xb8] sm:$0xff]
        %v957 = vld [vmem:[#allocation2 + $0xc0] sm:$0xff]
        %v958 = vld [vmem:[#allocation2 + $0xc8] sm:$0xff]
        %v959 = vld [vmem:[#allocation2 + $0xd0] sm:$0xff]
        %v960 = vld [vmem:[#allocation2 + $0xd8] sm:$0xff]
        %v961 = vld [vmem:[#allocation2 + $0xe0] sm:$0xff]
        %v962 = vld [vmem:[#allocation2 + $0xe8] sm:$0xff]
        %v963 = vld [vmem:[#allocation2 + $0xf0] sm:$0xff]
        %v964 = vld [vmem:[#allocation2 + $0xf8] sm:$0xff]
        %v965 = vld [vmem:[#allocation8] sm:$0xff]
        %v966 = vld [vmem:[#allocation8 + $0x8] sm:$0xff]
        %v967 = vld [vmem:[#allocation8 + $0x10] sm:$0xff]
        %v968 = vld [vmem:[#allocation8 + $0x18] sm:$0xff]
        %v969 = vld [vmem:[#allocation8 + $0x20] sm:$0xff]
        %v970 = vld [vmem:[#allocation8 + $0x28] sm:$0xff]
        %v971 = vld [vmem:[#allocation8 + $0x30] sm:$0xff]
        %v972 = vld [vmem:[#allocation8 + $0x38] sm:$0xff]
        %v974 = vsel %vm408, %v933, 0
        %v977 = vsel %vm408, %v934, 0
        %v980 = vsel %vm408, %v935, 0
        %v983 = vsel %vm408, %v936, 0
        %v986 = vsel %vm408, %v937, 0
        %v989 = vsel %vm408, %v938, 0
        %v992 = vsel %vm408, %v939, 0
        %v995 = vsel %vm408, %v940, 0
        %v998 = vsel %vm408, %v941, 0
        %v1001 = vsel %vm408, %v942, 0
        %v1004 = vsel %vm408, %v943, 0
        %v1007 = vsel %vm408, %v944, 0
        %v1010 = vsel %vm408, %v945, 0
        %v1013 = vsel %vm408, %v946, 0
        %v1016 = vsel %vm408, %v947, 0
        %v1019 = vsel %vm408, %v948, 0
        %v1022 = vsel %vm408, %v949, 0
        %v1025 = vsel %vm408, %v950, 0
        %v1028 = vsel %vm408, %v951, 0
        %v1031 = vsel %vm408, %v952, 0
        %v1034 = vsel %vm408, %v953, 0
        %v1037 = vsel %vm408, %v954, 0
        %v1040 = vsel %vm408, %v955, 0
        %v1043 = vsel %vm408, %v956, 0
        %v1046 = vsel %vm408, %v957, 0
        %v1049 = vsel %vm408, %v958, 0
        %v1052 = vsel %vm408, %v959, 0
        %v1055 = vsel %vm408, %v960, 0
        %v1058 = vsel %vm408, %v961, 0
        %v1061 = vsel %vm408, %v962, 0
        %v1064 = vsel %vm408, %v963, 0
        %v1067 = vsel %vm408, %v964, 0
        %1069 = vmatpush.msra.mxu0 0.0
        %1070 = vmatpush.msra.mxu0 0.0
        %1071 = vmatpush.msra.mxu0 0.0
        %1072 = vmatpush.msra.mxu0 0.0
        %1073 = vmatpush.msra.mxu0 0.0
        %1074 = vmatpush.msra.mxu0 0.0
        %1075 = vmatpush.msra.mxu0 0.0
        %1076 = vmatpush.msra.mxu0 0.0
        %1077 = vmatpush.msra.mxu0 %v972
        %1078 = vmatpush.msra.mxu0 %v971
        %1079 = vmatpush.msra.mxu0 %v970
        %1080 = vmatpush.msra.mxu0 %v969
        %1081 = vmatpush.msra.mxu0 %v968
        %1082 = vmatpush.msra.mxu0 %v967
        %1083 = vmatpush.msra.mxu0 %v966
        %1084 = vmatpush.msra.mxu0 %v965
        %1085 = vmatmul.f32.gmra.mxu0 %v974
        %v1086 = vpop.f32.mrf.mxu0
        %v1087 = vadd.f32 0.0, %v1086
        %1088 = vmatmul.f32.gmra.mxu0 %v977
        %v1089 = vpop.f32.mrf.mxu0
        %v1090 = vadd.f32 0.0, %v1089
        %1091 = vmatmul.f32.gmra.mxu0 %v980
        %v1092 = vpop.f32.mrf.mxu0
        %v1093 = vadd.f32 0.0, %v1092
        %1094 = vmatmul.f32.gmra.mxu0 %v983
        %v1095 = vpop.f32.mrf.mxu0
        %v1096 = vadd.f32 0.0, %v1095
        %1097 = vmatmul.f32.gmra.mxu0 %v986
        %v1098 = vpop.f32.mrf.mxu0
        %v1099 = vadd.f32 0.0, %v1098
        %1100 = vmatmul.f32.gmra.mxu0 %v989
        %v1101 = vpop.f32.mrf.mxu0
        %v1102 = vadd.f32 0.0, %v1101
        %1103 = vmatmul.f32.gmra.mxu0 %v992
        %v1104 = vpop.f32.mrf.mxu0
        %v1105 = vadd.f32 0.0, %v1104
        %1106 = vmatmul.f32.gmra.mxu0 %v995
        %v1107 = vpop.f32.mrf.mxu0
        %v1108 = vadd.f32 0.0, %v1107
        %1109 = vmatmul.f32.gmra.mxu0 %v998
        %v1110 = vpop.f32.mrf.mxu0
        %v1111 = vadd.f32 0.0, %v1110
        %1112 = vmatmul.f32.gmra.mxu0 %v1001
        %v1113 = vpop.f32.mrf.mxu0
        %v1114 = vadd.f32 0.0, %v1113
        %1115 = vmatmul.f32.gmra.mxu0 %v1004
        %v1116 = vpop.f32.mrf.mxu0
        %v1117 = vadd.f32 0.0, %v1116
        %1118 = vmatmul.f32.gmra.mxu0 %v1007
        %v1119 = vpop.f32.mrf.mxu0
        %v1120 = vadd.f32 0.0, %v1119
        %1121 = vmatmul.f32.gmra.mxu0 %v1010
        %v1122 = vpop.f32.mrf.mxu0
        %v1123 = vadd.f32 0.0, %v1122
        %1124 = vmatmul.f32.gmra.mxu0 %v1013
        %v1125 = vpop.f32.mrf.mxu0
        %v1126 = vadd.f32 0.0, %v1125
        %1127 = vmatmul.f32.gmra.mxu0 %v1016
        %v1128 = vpop.f32.mrf.mxu0
        %v1129 = vadd.f32 0.0, %v1128
        %1130 = vmatmul.f32.gmra.mxu0 %v1019
        %v1131 = vpop.f32.mrf.mxu0
        %v1132 = vadd.f32 0.0, %v1131
        %1133 = vmatmul.f32.gmra.mxu0 %v1022
        %v1134 = vpop.f32.mrf.mxu0
        %v1135 = vadd.f32 0.0, %v1134
        %1136 = vmatmul.f32.gmra.mxu0 %v1025
        %v1137 = vpop.f32.mrf.mxu0
        %v1138 = vadd.f32 0.0, %v1137
        %1139 = vmatmul.f32.gmra.mxu0 %v1028
        %v1140 = vpop.f32.mrf.mxu0
        %v1141 = vadd.f32 0.0, %v1140
        %1142 = vmatmul.f32.gmra.mxu0 %v1031
        %v1143 = vpop.f32.mrf.mxu0
        %v1144 = vadd.f32 0.0, %v1143
        %1145 = vmatmul.f32.gmra.mxu0 %v1034
        %v1146 = vpop.f32.mrf.mxu0
        %v1147 = vadd.f32 0.0, %v1146
        %1148 = vmatmul.f32.gmra.mxu0 %v1037
        %v1149 = vpop.f32.mrf.mxu0
        %v1150 = vadd.f32 0.0, %v1149
        %1151 = vmatmul.f32.gmra.mxu0 %v1040
        %v1152 = vpop.f32.mrf.mxu0
        %v1153 = vadd.f32 0.0, %v1152
        %1154 = vmatmul.f32.gmra.mxu0 %v1043
        %v1155 = vpop.f32.mrf.mxu0
        %v1156 = vadd.f32 0.0, %v1155
        %1157 = vmatmul.f32.gmra.mxu0 %v1046
        %v1158 = vpop.f32.mrf.mxu0
        %v1159 = vadd.f32 0.0, %v1158
        %1160 = vmatmul.f32.gmra.mxu0 %v1049
        %v1161 = vpop.f32.mrf.mxu0
        %v1162 = vadd.f32 0.0, %v1161
        %1163 = vmatmul.f32.gmra.mxu0 %v1052
        %v1164 = vpop.f32.mrf.mxu0
        %v1165 = vadd.f32 0.0, %v1164
        %1166 = vmatmul.f32.gmra.mxu0 %v1055
        %v1167 = vpop.f32.mrf.mxu0
        %v1168 = vadd.f32 0.0, %v1167
        %1169 = vmatmul.f32.gmra.mxu0 %v1058
        %v1170 = vpop.f32.mrf.mxu0
        %v1171 = vadd.f32 0.0, %v1170
        %1172 = vmatmul.f32.gmra.mxu0 %v1061
        %v1173 = vpop.f32.mrf.mxu0
        %v1174 = vadd.f32 0.0, %v1173
        %1175 = vmatmul.f32.gmra.mxu0 %v1064
        %v1176 = vpop.f32.mrf.mxu0
        %v1177 = vadd.f32 0.0, %v1176
        %1178 = vmatmul.f32.gmra.mxu0 %v1067
        %v1179 = vpop.f32.mrf.mxu0
        %v1180 = vadd.f32 0.0, %v1179
        %1181 = vdwg.mxu0
        %v1182 = vld [vmem:[#allocation9] sm:$0xff]
        %v1183 = vld [vmem:[#allocation9 + $0x8] sm:$0xff]
        %v1184 = vld [vmem:[#allocation9 + $0x10] sm:$0xff]
        %v1185 = vld [vmem:[#allocation9 + $0x18] sm:$0xff]
        %v1186 = vld [vmem:[%s4] sm:$0x7]
        %v1187 = vld [vmem:[%s5] sm:$0x7]
        %v1188 = vadd.f32 %v1087, %v1182
        %v1189 = vadd.f32 %v1090, %v1183
        %v1190 = vadd.f32 %v1093, %v1184
        %v1191 = vadd.f32 %v1096, %v1185
        %v1192 = vmax.f32 %v1188, 0.0
        %v1193 = vmax.f32 %v1189, 0.0
        %v1194 = vmax.f32 %v1190, 0.0
        %v1195 = vmax.f32 %v1191, 0.0
        %1197 = vset.pattern.permute.xlu0 0
        %1198 = vperm.xlu0 %1197, %v1187
        %v1199 = vpop.permute.xlu0 %1198
        %vm1201 = vcmask 261120
        %v1203 = vsel %vm1201, %v1186, 0
        %1205 = vmatpush.msra.mxu0 0.0
        %1206 = vmatpush.msra.mxu0 0.0
        %1207 = vmatpush.msra.mxu0 0.0
        %1208 = vmatpush.msra.mxu0 0.0
        %1209 = vmatpush.msra.mxu0 0.0
        %1210 = vmatpush.msra.mxu0 0.0
        %1211 = vmatpush.msra.mxu0 0.0
        %1212 = vmatpush.msra.mxu0 0.0
        %1213 = vmatpush.msra.mxu0 0.0
        %1214 = vmatpush.msra.mxu0 0.0
        %1215 = vmatpush.msra.mxu0 0.0
        %1216 = vmatpush.msra.mxu0 0.0
        %1217 = vmatpush.msra.mxu0 %v1195
        %1218 = vmatpush.msra.mxu0 %v1194
        %1219 = vmatpush.msra.mxu0 %v1193
        %1220 = vmatpush.msra.mxu0 %v1192
        %1221 = vmatmul.f32.gmra.mxu0 %v1203
        %v1222 = vpop.f32.mrf.mxu0
        %v1223 = vadd.f32 %v1199, %v1222
        %1224 = vdwg.mxu0
        %v1225 = vmax.f32 %v1223, 0.0
        %1226 = vst [vmem:[#allocation3] sm:$0x7] %v1225
        %v1227 = vadd.f32 %v1099, %v1182
        %v1228 = vadd.f32 %v1102, %v1183
        %v1229 = vadd.f32 %v1105, %v1184
        %v1230 = vadd.f32 %v1108, %v1185
        %v1231 = vmax.f32 %v1227, 0.0
        %v1232 = vmax.f32 %v1228, 0.0
        %v1233 = vmax.f32 %v1229, 0.0
        %v1234 = vmax.f32 %v1230, 0.0
        %1235 = vmatpush.msra.mxu0 0.0
        %1236 = vmatpush.msra.mxu0 0.0
        %1237 = vmatpush.msra.mxu0 0.0
        %1238 = vmatpush.msra.mxu0 0.0
        %1239 = vmatpush.msra.mxu0 0.0
        %1240 = vmatpush.msra.mxu0 0.0
        %1241 = vmatpush.msra.mxu0 0.0
        %1242 = vmatpush.msra.mxu0 0.0
        %1243 = vmatpush.msra.mxu0 0.0
        %1244 = vmatpush.msra.mxu0 0.0
        %1245 = vmatpush.msra.mxu0 0.0
        %1246 = vmatpush.msra.mxu0 0.0
        %1247 = vmatpush.msra.mxu0 %v1234
        %1248 = vmatpush.msra.mxu0 %v1233
        %1249 = vmatpush.msra.mxu0 %v1232
        %1250 = vmatpush.msra.mxu0 %v1231
        %1251 = vmatmul.f32.gmra.mxu0 %v1203
        %v1252 = vpop.f32.mrf.mxu0
        %v1253 = vadd.f32 %v1199, %v1252
        %1254 = vdwg.mxu0
        %v1255 = vmax.f32 %v1253, 0.0
        %1256 = vst [vmem:[#allocation3 + $0x3] sm:$0x7] %v1255
        %v1257 = vadd.f32 %v1111, %v1182
        %v1258 = vadd.f32 %v1114, %v1183
        %v1259 = vadd.f32 %v1117, %v1184
        %v1260 = vadd.f32 %v1120, %v1185
        %v1261 = vmax.f32 %v1257, 0.0
        %v1262 = vmax.f32 %v1258, 0.0
        %v1263 = vmax.f32 %v1259, 0.0
        %v1264 = vmax.f32 %v1260, 0.0
        %1265 = vmatpush.msra.mxu0 0.0
        %1266 = vmatpush.msra.mxu0 0.0
        %1267 = vmatpush.msra.mxu0 0.0
        %1268 = vmatpush.msra.mxu0 0.0
        %1269 = vmatpush.msra.mxu0 0.0
        %1270 = vmatpush.msra.mxu0 0.0
        %1271 = vmatpush.msra.mxu0 0.0
        %1272 = vmatpush.msra.mxu0 0.0
        %1273 = vmatpush.msra.mxu0 0.0
        %1274 = vmatpush.msra.mxu0 0.0
        %1275 = vmatpush.msra.mxu0 0.0
        %1276 = vmatpush.msra.mxu0 0.0
        %1277 = vmatpush.msra.mxu0 %v1264
        %1278 = vmatpush.msra.mxu0 %v1263
        %1279 = vmatpush.msra.mxu0 %v1262
        %1280 = vmatpush.msra.mxu0 %v1261
        %1281 = vmatmul.f32.gmra.mxu0 %v1203
        %v1282 = vpop.f32.mrf.mxu0
        %v1283 = vadd.f32 %v1199, %v1282
        %1284 = vdwg.mxu0
        %v1285 = vmax.f32 %v1283, 0.0
        %1286 = vst [vmem:[#allocation3 + $0x6] sm:$0x7] %v1285
        %v1287 = vadd.f32 %v1123, %v1182
        %v1288 = vadd.f32 %v1126, %v1183
        %v1289 = vadd.f32 %v1129, %v1184
        %v1290 = vadd.f32 %v1132, %v1185
        %v1291 = vmax.f32 %v1287, 0.0
        %v1292 = vmax.f32 %v1288, 0.0
        %v1293 = vmax.f32 %v1289, 0.0
        %v1294 = vmax.f32 %v1290, 0.0
        %1295 = vmatpush.msra.mxu0 0.0
        %1296 = vmatpush.msra.mxu0 0.0
        %1297 = vmatpush.msra.mxu0 0.0
        %1298 = vmatpush.msra.mxu0 0.0
        %1299 = vmatpush.msra.mxu0 0.0
        %1300 = vmatpush.msra.mxu0 0.0
        %1301 = vmatpush.msra.mxu0 0.0
        %1302 = vmatpush.msra.mxu0 0.0
        %1303 = vmatpush.msra.mxu0 0.0
        %1304 = vmatpush.msra.mxu0 0.0
        %1305 = vmatpush.msra.mxu0 0.0
        %1306 = vmatpush.msra.mxu0 0.0
        %1307 = vmatpush.msra.mxu0 %v1294
        %1308 = vmatpush.msra.mxu0 %v1293
        %1309 = vmatpush.msra.mxu0 %v1292
        %1310 = vmatpush.msra.mxu0 %v1291
        %1311 = vmatmul.f32.gmra.mxu0 %v1203
        %v1312 = vpop.f32.mrf.mxu0
        %v1313 = vadd.f32 %v1199, %v1312
        %1314 = vdwg.mxu0
        %v1315 = vmax.f32 %v1313, 0.0
        %1316 = vst [vmem:[#allocation3 + $0x9] sm:$0x7] %v1315
        %v1317 = vadd.f32 %v1135, %v1182
        %v1318 = vadd.f32 %v1138, %v1183
        %v1319 = vadd.f32 %v1141, %v1184
        %v1320 = vadd.f32 %v1144, %v1185
        %v1321 = vmax.f32 %v1317, 0.0
        %v1322 = vmax.f32 %v1318, 0.0
        %v1323 = vmax.f32 %v1319, 0.0
        %v1324 = vmax.f32 %v1320, 0.0
        %1325 = vmatpush.msra.mxu0 0.0
        %1326 = vmatpush.msra.mxu0 0.0
        %1327 = vmatpush.msra.mxu0 0.0
        %1328 = vmatpush.msra.mxu0 0.0
        %1329 = vmatpush.msra.mxu0 0.0
        %1330 = vmatpush.msra.mxu0 0.0
        %1331 = vmatpush.msra.mxu0 0.0
        %1332 = vmatpush.msra.mxu0 0.0
        %1333 = vmatpush.msra.mxu0 0.0
        %1334 = vmatpush.msra.mxu0 0.0
        %1335 = vmatpush.msra.mxu0 0.0
        %1336 = vmatpush.msra.mxu0 0.0
        %1337 = vmatpush.msra.mxu0 %v1324
        %1338 = vmatpush.msra.mxu0 %v1323
        %1339 = vmatpush.msra.mxu0 %v1322
        %1340 = vmatpush.msra.mxu0 %v1321
        %1341 = vmatmul.f32.gmra.mxu0 %v1203
        %v1342 = vpop.f32.mrf.mxu0
        %v1343 = vadd.f32 %v1199, %v1342
        %1344 = vdwg.mxu0
        %v1345 = vmax.f32 %v1343, 0.0
        %1346 = vst [vmem:[#allocation3 + $0xc] sm:$0x7] %v1345
        %v1347 = vadd.f32 %v1147, %v1182
        %v1348 = vadd.f32 %v1150, %v1183
        %v1349 = vadd.f32 %v1153, %v1184
        %v1350 = vadd.f32 %v1156, %v1185
        %v1351 = vmax.f32 %v1347, 0.0
        %v1352 = vmax.f32 %v1348, 0.0
        %v1353 = vmax.f32 %v1349, 0.0
        %v1354 = vmax.f32 %v1350, 0.0
        %1355 = vmatpush.msra.mxu0 0.0
        %1356 = vmatpush.msra.mxu0 0.0
        %1357 = vmatpush.msra.mxu0 0.0
        %1358 = vmatpush.msra.mxu0 0.0
        %1359 = vmatpush.msra.mxu0 0.0
        %1360 = vmatpush.msra.mxu0 0.0
        %1361 = vmatpush.msra.mxu0 0.0
        %1362 = vmatpush.msra.mxu0 0.0
        %1363 = vmatpush.msra.mxu0 0.0
        %1364 = vmatpush.msra.mxu0 0.0
        %1365 = vmatpush.msra.mxu0 0.0
        %1366 = vmatpush.msra.mxu0 0.0
        %1367 = vmatpush.msra.mxu0 %v1354
        %1368 = vmatpush.msra.mxu0 %v1353
        %1369 = vmatpush.msra.mxu0 %v1352
        %1370 = vmatpush.msra.mxu0 %v1351
        %1371 = vmatmul.f32.gmra.mxu0 %v1203
        %v1372 = vpop.f32.mrf.mxu0
        %v1373 = vadd.f32 %v1199, %v1372
        %1374 = vdwg.mxu0
        %v1375 = vmax.f32 %v1373, 0.0
        %1376 = vst [vmem:[#allocation3 + $0xf] sm:$0x7] %v1375
        %v1377 = vadd.f32 %v1159, %v1182
        %v1378 = vadd.f32 %v1162, %v1183
        %v1379 = vadd.f32 %v1165, %v1184
        %v1380 = vadd.f32 %v1168, %v1185
        %v1381 = vmax.f32 %v1377, 0.0
        %v1382 = vmax.f32 %v1378, 0.0
        %v1383 = vmax.f32 %v1379, 0.0
        %v1384 = vmax.f32 %v1380, 0.0
        %1385 = vmatpush.msra.mxu0 0.0
        %1386 = vmatpush.msra.mxu0 0.0
        %1387 = vmatpush.msra.mxu0 0.0
        %1388 = vmatpush.msra.mxu0 0.0
        %1389 = vmatpush.msra.mxu0 0.0
        %1390 = vmatpush.msra.mxu0 0.0
        %1391 = vmatpush.msra.mxu0 0.0
        %1392 = vmatpush.msra.mxu0 0.0
        %1393 = vmatpush.msra.mxu0 0.0
        %1394 = vmatpush.msra.mxu0 0.0
        %1395 = vmatpush.msra.mxu0 0.0
        %1396 = vmatpush.msra.mxu0 0.0
        %1397 = vmatpush.msra.mxu0 %v1384
        %1398 = vmatpush.msra.mxu0 %v1383
        %1399 = vmatpush.msra.mxu0 %v1382
        %1400 = vmatpush.msra.mxu0 %v1381
        %1401 = vmatmul.f32.gmra.mxu0 %v1203
        %v1402 = vpop.f32.mrf.mxu0
        %v1403 = vadd.f32 %v1199, %v1402
        %1404 = vdwg.mxu0
        %v1405 = vmax.f32 %v1403, 0.0
        %1406 = vst [vmem:[#allocation3 + $0x12] sm:$0x7] %v1405
        %v1407 = vadd.f32 %v1171, %v1182
        %v1408 = vadd.f32 %v1174, %v1183
        %v1409 = vadd.f32 %v1177, %v1184
        %v1410 = vadd.f32 %v1180, %v1185
        %v1411 = vmax.f32 %v1407, 0.0
        %v1412 = vmax.f32 %v1408, 0.0
        %v1413 = vmax.f32 %v1409, 0.0
        %v1414 = vmax.f32 %v1410, 0.0
        %1415 = vmatpush.msra.mxu0 0.0
        %1416 = vmatpush.msra.mxu0 0.0
        %1417 = vmatpush.msra.mxu0 0.0
        %1418 = vmatpush.msra.mxu0 0.0
        %1419 = vmatpush.msra.mxu0 0.0
        %1420 = vmatpush.msra.mxu0 0.0
        %1421 = vmatpush.msra.mxu0 0.0
        %1422 = vmatpush.msra.mxu0 0.0
        %1423 = vmatpush.msra.mxu0 0.0
        %1424 = vmatpush.msra.mxu0 0.0
        %1425 = vmatpush.msra.mxu0 0.0
        %1426 = vmatpush.msra.mxu0 0.0
        %1427 = vmatpush.msra.mxu0 %v1414
        %1428 = vmatpush.msra.mxu0 %v1413
        %1429 = vmatpush.msra.mxu0 %v1412
        %1430 = vmatpush.msra.mxu0 %v1411
        %1431 = vmatmul.f32.gmra.mxu0 %v1203
        %v1432 = vpop.f32.mrf.mxu0
        %v1433 = vadd.f32 %v1199, %v1432
        %1434 = vdwg.mxu0
        %v1435 = vmax.f32 %v1433, 0.0
        %1436 = vst [vmem:[#allocation3 + $0x15] sm:$0x7] %v1435
        %v1437 = vld [vmem:[#allocation3] sm:$0xff]
        %v1438 = vld [vmem:[#allocation3 + $0x8] sm:$0xff]
        %v1439 = vld [vmem:[#allocation3 + $0x10] sm:$0xff]
        %v1440 = vld [vmem:[#allocation11] sm:$0xff]
        %v1441 = vld [vmem:[#allocation11 + $0x8] sm:$0xff]
        %v1442 = vld [vmem:[#allocation11 + $0x10] sm:$0xff]
        %v1443 = vld [vmem:[#allocation11 + $0x18] sm:$0xff]
        %v1444 = vld [vmem:[#allocation11 + $0x20] sm:$0xff]
        %v1445 = vld [vmem:[#allocation11 + $0x28] sm:$0xff]
        %v1446 = vld [vmem:[#allocation11 + $0x30] sm:$0xff]
        %v1447 = vld [vmem:[#allocation11 + $0x38] sm:$0xff]
        %v1448 = vld [vmem:[#allocation11 + $0x40] sm:$0xff]
        %v1449 = vld [vmem:[#allocation11 + $0x48] sm:$0xff]
        %v1450 = vld [vmem:[#allocation11 + $0x50] sm:$0xff]
        %v1451 = vld [vmem:[#allocation11 + $0x58] sm:$0xff]
        %v1452 = vld [vmem:[#allocation11 + $0x60] sm:$0xff]
        %v1453 = vld [vmem:[#allocation11 + $0x68] sm:$0xff]
        %v1454 = vld [vmem:[#allocation11 + $0x70] sm:$0xff]
        %v1455 = vld [vmem:[#allocation11 + $0x78] sm:$0xff]
        %v1456 = vld [vmem:[%s7] sm:$0x1]
        %v1458 = vperm.slane %v1456, 0
        %1460 = vmatpush.msra.mxu0 %v1455
        %1461 = vmatpush.msra.mxu0 %v1454
        %1462 = vmatpush.msra.mxu0 %v1453
        %1463 = vmatpush.msra.mxu0 %v1452
        %1464 = vmatpush.msra.mxu0 %v1451
        %1465 = vmatpush.msra.mxu0 %v1450
        %1466 = vmatpush.msra.mxu0 %v1449
        %1467 = vmatpush.msra.mxu0 %v1448
        %1468 = vmatpush.msra.mxu0 %v1447
        %1469 = vmatpush.msra.mxu0 %v1446
        %1470 = vmatpush.msra.mxu0 %v1445
        %1471 = vmatpush.msra.mxu0 %v1444
        %1472 = vmatpush.msra.mxu0 %v1443
        %1473 = vmatpush.msra.mxu0 %v1442
        %1474 = vmatpush.msra.mxu0 %v1441
        %1475 = vmatpush.msra.mxu0 %v1440
        %1476 = vmatmul.f32.gmra.mxu0 %v1437
        %v1477 = vpop.f32.mrf.mxu0
        %v1478 = vadd.f32 %v1458, %v1477
        %1479 = vmatmul.f32.gmra.mxu0 %v1438
        %v1480 = vpop.f32.mrf.mxu0
        %v1481 = vadd.f32 %v1458, %v1480
        %1482 = vmatmul.f32.gmra.mxu0 %v1439
        %v1483 = vpop.f32.mrf.mxu0
        %v1484 = vadd.f32 %v1458, %v1483
        %1485 = vdwg.mxu0
        %v1486 = vxor.u32 %v1478, 2147483648
        %v1487 = vxor.u32 %v1481, 2147483648
        %v1488 = vxor.u32 %v1484, 2147483648
        %v1489 = vmul.f32 %v1486, 1.442695
        %v1490 = vpow.pop %v1489
        %v1491 = vmul.f32 %v1487, 1.442695
        %v1492 = vpow.pop %v1491
        %v1493 = vmul.f32 %v1488, 1.442695
        %v1494 = vpow.pop %v1493
        %v1495 = vadd.f32 %v1490, 1.0
        %v1496 = vadd.f32 %v1492, 1.0
        %v1497 = vadd.f32 %v1494, 1.0
        %v1498 = vrcp.pop %v1495
        %v1499 = vmul.f32 %v1495, %v1498
        %v1500 = vsub.f32 1.0, %v1499
        %v1501 = vmul.f32 %v1498, %v1500
        %v1502 = vadd.f32 %v1498, %v1501
        %vm1503 = vweird.f32 %v1495
        %vm1504 = vweird.f32 %v1498
        %vm1505 = vmor %vm1503, %vm1504
        %v1506 = vsel %vm1505, %v1498, %v1502
        %v1507 = vand.u32 2147483647, %v1495
        %vm1508 = vcmp.eq.f32.partialorder %v1507, 8.507059e+37
        %v1509 = vand.u32 %v1495, 2147483648
        %v1510 = vor.u32 1.1754944e-38, %v1509
        %v1511 = vsel %vm1508, %v1510, %v1506
        %v1512 = vmul.f32 1.0, %v1511
        %v1513 = vrcp.pop %v1496
        %v1514 = vmul.f32 %v1496, %v1513
        %v1515 = vsub.f32 1.0, %v1514
        %v1516 = vmul.f32 %v1513, %v1515
        %v1517 = vadd.f32 %v1513, %v1516
        %vm1518 = vweird.f32 %v1496
        %vm1519 = vweird.f32 %v1513
        %vm1520 = vmor %vm1518, %vm1519
        %v1521 = vsel %vm1520, %v1513, %v1517
        %v1522 = vand.u32 2147483647, %v1496
        %vm1523 = vcmp.eq.f32.partialorder %v1522, 8.507059e+37
        %v1524 = vand.u32 %v1496, 2147483648
        %v1525 = vor.u32 1.1754944e-38, %v1524
        %v1526 = vsel %vm1523, %v1525, %v1521
        %v1527 = vmul.f32 1.0, %v1526
        %v1528 = vrcp.pop %v1497
        %v1529 = vmul.f32 %v1497, %v1528
        %v1530 = vsub.f32 1.0, %v1529
        %v1531 = vmul.f32 %v1528, %v1530
        %v1532 = vadd.f32 %v1528, %v1531
        %vm1533 = vweird.f32 %v1497
        %vm1534 = vweird.f32 %v1528
        %vm1535 = vmor %vm1533, %vm1534
        %v1536 = vsel %vm1535, %v1528, %v1532
        %v1537 = vand.u32 2147483647, %v1497
        %vm1538 = vcmp.eq.f32.partialorder %v1537, 8.507059e+37
        %v1539 = vand.u32 %v1497, 2147483648
        %v1540 = vor.u32 1.1754944e-38, %v1539
        %v1541 = vsel %vm1538, %v1540, %v1536
        %v1542 = vmul.f32 1.0, %v1541
        %1543 = vst [vmem:[%s394] sm:$0xff] %v1512
        %1544 = vst [vmem:[%s394 + $0x8] sm:$0xff] %v1527
        %1545 = vst [vmem:[%s394 + $0x10] sm:$0xff] %v1542
        %s1546 = smul.u32 3, %s24
        %p1547 = scmp.lt.s32.totalorder %s1546, 5
        %s1548 = scalar_select %p1547, %s1546, 5
        %s1549 = smul.addr %s1548, 8
        %s1550 = scalar_lea.vmem %s8, %s1549
        // Predicated region
        $region73: #{characteristic_line_reverser.1} parent=51 // pred_check
          %p1551 = pneg %p215
        $region74: #{characteristic_line_reverser.1} parent=51 // pred_check_branch
          %1553 = sbr.rel (%p1551) target = $region76
        $region75: #{characteristic_line_reverser.1} parent=51 // pred_region
          %s1554 = smul.u32 3, %s24
        $region76: #{characteristic_line_reverser.1} parent=51 // pred_fallthru
          _
      $region52: #{characteristic_line_reverser.1} parent=5 // pred_fallthru
        _
      %p1555 = scmp.le.s32.totalorder 2, %s19
      // Predicated region
      $region77: #{characteristic_line_reverser.1} parent=5 // pred_check
        %p1556 = pneg %p1555
      $region78: #{characteristic_line_reverser.1} parent=5 // pred_check_branch
        %1558 = sbr.rel (%p1556) target = $region80
      $region79: #{characteristic_line_reverser.1} parent=5 // pred_region
        %s1559 = ssub.s32 %s19, 2
        // Predicated region
        $region81: #{characteristic_line_reverser.1} parent=79 // pred_check
          %p1560 = pneg %p221
        $region82: #{characteristic_line_reverser.1} parent=79 // pred_check_branch
          %1562 = sbr.rel (%p1560) target = $region84
        $region83: #{characteristic_line_reverser.1} parent=79 // pred_region
          %s1563 = smul.u32 3, %s25
          %p1564 = scmp.lt.s32.totalorder %s1563, 5
          %s1565 = scalar_select %p1564, %s1563, 5
          %s1566 = smul.addr %s1565, 8
          %s1567 = scalar_lea.vmem %s8, %s1566
        $region84: #{characteristic_line_reverser.1} parent=79 // pred_fallthru
          _
      $region80: #{characteristic_line_reverser.1} parent=5 // pred_fallthru
        _
    $region6: #{characteristic_line_reverser.1} parent=1 // loop_footer
      %s23 = sadd.s32 1, %s19
    $region7: #{characteristic_line_reverser.1} parent=1 // loop_footer_branch
      %18 = sbr.rel target = $region3
    $region8: #{characteristic_line_reverser.1} parent=1 // loop_exit
      _
    %1568 = vsyncpa [#allocation5], 1
    %s1569 = scalar_lea.sflag [#allocation5], 1
    %1570 = vsyncpa %s1569, 1
    %1571 = vsyncpa [#allocation7], 1
    %1572 = vsyncpa [#allocation10], 1

</llo_original>
